<compile_context>
chip_gen: v7x
topology: tpu7x:2x2x1
jax: 0.10.0
libtpu: 0.0.40
codegen_flags: <defaults>
</compile_context>

<pallas_src>
import numpy as np
import jax
import jax.numpy as jnp
from jax.experimental import pallas as pl
from jax.experimental.pallas import tpu as pltpu


# --------------------------- bilinear resize matrices ---------------------------

def _bilinear_matrix(in_size, out_size, align_corners):
    """Row-stochastic (out,in) matrix reproducing F.interpolate(mode='bilinear')."""
    out = np.arange(out_size, dtype=np.float64)
    if align_corners:
        src = np.zeros_like(out) if out_size == 1 else out * (in_size - 1) / (out_size - 1)
    else:
        src = (out + 0.5) * (in_size / out_size) - 0.5
        src = np.maximum(src, 0.0)
    i0 = np.minimum(np.floor(src).astype(np.int64), in_size - 1)
    i1 = np.minimum(i0 + 1, in_size - 1)
    frac = src - i0
    m = np.zeros((out_size, in_size), dtype=np.float64)
    rows = np.arange(out_size)
    np.add.at(m, (rows, i0), 1.0 - frac)
    np.add.at(m, (rows, i1), frac)
    return m


def _resize_matrix_t(in_hw, out_hw, align_corners):
    """(Hi*Wi, Ho*Wo) matrix RT so that  x_flat(C, Hi*Wi) @ RT  is the bilinear resize."""
    mh = _bilinear_matrix(in_hw[0], out_hw[0], align_corners)
    mw = _bilinear_matrix(in_hw[1], out_hw[1], align_corners)
    return np.kron(mh, mw).T.astype(np.float32)


def _row_tile(m, max_tile=1024):
    """Largest lane-dense tile of the output spatial dim (multiple of 128 or full)."""
    if m <= max_tile:
        return m
    for t in range(max_tile - max_tile % 128, 127, -128):
        if m % t == 0:
            return t
    return m


# ----------------------------- fused forward kernel ------------------------------

def _make_fused_kernel(num_scales):
    def kernel(*refs):
        x_refs = refs[0:num_scales]                 # (1, C_i, HiWi)   compute dtype
        rt_refs = refs[num_scales:2 * num_scales]   # (HiWi, TM)       compute dtype
        w_refs = refs[2 * num_scales:3 * num_scales]  # (oc, C_i)      compute dtype
        b_ref = refs[3 * num_scales]                # (ns, oc, 1)      f32
        wf_ref = refs[3 * num_scales + 1]           # (ns, oc, oc)     compute dtype
        bf_ref = refs[3 * num_scales + 2]           # (oc, 1)          f32
        o_ref = refs[3 * num_scales + 3]            # (1, oc, TM)      f32

        acc = None
        for i in range(num_scales):
            x = x_refs[i][0]                        # (C_i, HiWi)
            w = w_refs[i][...]                      # (oc, C_i)
            rt = rt_refs[i][...]                    # (HiWi, TM)
            # 1x1 conv + folded BN + ReLU (channels-first), f32 accumulation.
            t = jnp.dot(w, x, preferred_element_type=jnp.float32)
            t = jnp.maximum(t + b_ref[i], 0.0).astype(rt.dtype)      # (oc, HiWi)
            # Bilinear resize as a single matmul against the Kronecker matrix.
            z = jnp.dot(t, rt, preferred_element_type=jnp.float32)   # (oc, TM)
            z = z.astype(rt.dtype)
            # Fusion conv partial for this scale (fuses the channel concat).
            p = jnp.dot(wf_ref[i], z, preferred_element_type=jnp.float32)
            acc = p if acc is None else acc + p
        acc = jnp.maximum(acc + bf_ref[...], 0.0)
        o_ref[0] = acc.astype(o_ref.dtype)

    return kernel


# --------------------------- ConvBNReLU (1x1) parameters -------------------------

def _init_conv_bn_relu(key, in_ch, out_ch, eps=1e-5):
    """Deterministic init of Conv2d(1x1, no bias) + BatchNorm2d, BN folded (eval mode)."""
    k1, k2, k3, k4 = jax.random.split(key, 4)
    w = jax.random.normal(k1, (out_ch, in_ch), jnp.float32) / np.sqrt(in_ch)
    gamma = 1.0 + 0.1 * jax.random.normal(k2, (out_ch,), jnp.float32)
    beta = 0.1 * jax.random.normal(k3, (out_ch,), jnp.float32)
    running_mean = 0.1 * jax.random.normal(k4, (out_ch,), jnp.float32)
    running_var = jnp.ones((out_ch,), jnp.float32)
    # TODO(synk): BN is folded with eval-mode running statistics; training-mode
    # batch statistics are not modeled.
    scale = gamma / jnp.sqrt(running_var + eps)
    w_eff = w * scale[:, None]                      # (out_ch, in_ch)  PyTorch conv layout
    b_eff = beta - running_mean * scale             # (out_ch,)
    return w_eff, b_eff


# ------------------------------------ SegFormer -----------------------------------

class SegFormerPallas:
    def __init__(self, backbone_channels, out_channels, align_corners, key,
                 compute_dtype=jnp.bfloat16):
        self.out_channels = out_channels
        self.align_corners = align_corners
        self.compute_dtype = compute_dtype
        ns = len(backbone_channels)
        keys = jax.random.split(key, ns + 1)

        self.scale_w = []
        scale_b = []
        for i, cin in enumerate(backbone_channels):
            w, b = _init_conv_bn_relu(keys[i], cin, out_channels)
            self.scale_w.append(w.astype(compute_dtype))          # (oc, cin)
            scale_b.append(b.reshape(out_channels, 1))
        self.b_stack = jnp.stack(scale_b, axis=0)                  # (ns, oc, 1) f32

        wf, bf = _init_conv_bn_relu(keys[-1], out_channels * ns, out_channels)
        # wf_stack[i] = Wf[:, i*oc:(i+1)*oc]  (the block acting on scale i's channels)
        self.wf_stack = (wf.reshape(out_channels, ns, out_channels)
                           .transpose(1, 0, 2).astype(compute_dtype))  # (ns, oc, oc)
        self.bf = bf.reshape(out_channels, 1)                      # (oc, 1) f32

    def __call__(self, *features):
        features = features[2:]                    # first two features are ignored
        ns = len(features)
        assert ns == len(self.scale_w)
        cd = self.compute_dtype
        oc = self.out_channels

        n = features[0].shape[0]
        h0, w0 = features[0].shape[2], features[0].shape[3]
        m_total = h0 * w0

        # NCHW -> (N, C, H*W): free reshape, no transpose (channels-first compute).
        xs = [f.reshape(f.shape[0], f.shape[1], -1).astype(cd) for f in features]
        rts = [jnp.asarray(_resize_matrix_t((f.shape[2], f.shape[3]), (h0, w0),
                                            self.align_corners), dtype=cd)
               for f in features]

        tm = _row_tile(m_total)
        grid = (n, m_total // tm)

        in_specs = []
        args = []
        block_bytes = 0

        def _add(arr, block_shape, index_map):
            nonlocal block_bytes
            in_specs.append(pl.BlockSpec(block_shape, index_map))
            args.append(arr)
            block_bytes += int(np.prod(block_shape)) * arr.dtype.itemsize

        # Per-scale activations: whole (C_i, HiWi) slab per batch element (resident
        # across the inner row-tile axis).
        for x in xs:
            _add(x, (1, x.shape[1], x.shape[2]), lambda b, m: (b, 0, 0))
        # Per-scale resize matrices: column tile follows the output row tile.
        for rt in rts:
            _add(rt, (rt.shape[0], tm), lambda b, m: (0, m))
        # Tiny folded conv weights: constant index map -> stay resident in VMEM.
        for w in self.scale_w:
            _add(w, w.shape, lambda b, m: (0, 0))
        _add(self.b_stack, self.b_stack.shape, lambda b, m: (0, 0, 0))
        _add(self.wf_stack, self.wf_stack.shape, lambda b, m: (0, 0, 0))
        _add(self.bf, self.bf.shape, lambda b, m: (0, 0))

        out_block = (1, oc, tm)
        block_bytes += int(np.prod(out_block)) * 4
        # Double-buffered inputs + output + headroom; keep within v7x's 64 MiB VMEM.
        vmem_limit = int(min(64 * 1024 * 1024,
                             max(16 * 1024 * 1024, 8 * block_bytes)))

        flops = 0
        for x in xs:
            c_i, hw_i = int(x.shape[1]), int(x.shape[2])
            flops += n * (2 * oc * c_i * hw_i          # 1x1 conv
                          + 2 * oc * hw_i * m_total    # resize matmul
                          + 2 * oc * oc * m_total)     # fusion partial
        bytes_accessed = sum(int(np.prod(a.shape)) * a.dtype.itemsize for a in args)
        bytes_accessed += n * oc * m_total * 4
        cost = pl.CostEstimate(flops=flops, transcendentals=0,
                               bytes_accessed=bytes_accessed)

        out = pl.pallas_call(
            _make_fused_kernel(ns),
            out_shape=jax.ShapeDtypeStruct((n, oc, m_total), jnp.float32),
            grid=grid,
            in_specs=in_specs,
            out_specs=pl.BlockSpec(out_block, lambda b, m: (b, 0, m)),
            compiler_params=pltpu.CompilerParams(
                dimension_semantics=("parallel", "parallel"),
                vmem_limit_bytes=vmem_limit),
            cost_estimate=cost,
        )(*args)

        return out.reshape(n, oc, h0, w0)


# ------------------------------ pure-JAX reference --------------------------------

def _reference_forward(model, feats):
    feats = feats[2:]
    h0, w0 = feats[0].shape[2], feats[0].shape[3]
    oc = model.out_channels
    outs = []
    for i, f in enumerate(feats):
        w = model.scale_w[i].astype(jnp.float32)
        b = model.b_stack[i, :, 0]
        y = jnp.einsum('oc,nchw->nohw', w, f) + b[None, :, None, None]
        y = jnp.maximum(y, 0.0)
        mh = jnp.asarray(_bilinear_matrix(f.shape[2], h0, model.align_corners), jnp.float32)
        mw = jnp.asarray(_bilinear_matrix(f.shape[3], w0, model.align_corners), jnp.float32)
        y = jnp.einsum('Hh,nohw->noHw', mh, y)
        y = jnp.einsum('Ww,noHw->noHW', mw, y)
        outs.append(y)
    cat = jnp.concatenate(outs, axis=1)
    wf_full = jnp.concatenate([model.wf_stack[i].astype(jnp.float32)
                               for i in range(len(feats))], axis=1)   # (oc, ns*oc)
    z = jnp.einsum('oc,nchw->nohw', wf_full, cat) + model.bf[:, 0][None, :, None, None]
    return jnp.maximum(z, 0.0)


# --------------------------------------- main --------------------------------------

if __name__ == "__main__":
    backbone_channels = [4, 8, 16, 16]
    out_channels = 32
    align_corners = False
    n = 2
    sizes = [(16, 16), (8, 8), (4, 4), (2, 2)]

    model = SegFormerPallas(backbone_channels, out_channels, align_corners,
                            jax.random.PRNGKey(42))

    key = jax.random.PRNGKey(0)
    fkeys = jax.random.split(key, 2 + len(backbone_channels))
    # two leading features that forward() slices off (features[2:])
    feats = [jax.random.normal(fkeys[0], (n, 3, 64, 64), jnp.float32),
             jax.random.normal(fkeys[1], (n, 3, 32, 32), jnp.float32)]
    for i, (cin, (h, w)) in enumerate(zip(backbone_channels, sizes)):
        feats.append(jax.random.normal(fkeys[2 + i], (n, cin, h, w), jnp.float32))

    out = model(*feats)
    out = jax.block_until_ready(out)
    assert out.shape == (n, out_channels, 16, 16), out.shape
    assert bool(jnp.all(jnp.isfinite(out)))

    # Validate against an f32 pure-JAX reference (bf16 operands, f32 accumulation:
    # allow a loose normalized tolerance).
    ref = jax.block_until_ready(_reference_forward(model, feats))
    err = float(jnp.max(jnp.abs(out - ref)) / (jnp.max(jnp.abs(ref)) + 1e-6))
    assert err < 0.05, f"normalized max error too large: {err}"

    print("KERNEL_OK")
</pallas_src>

<mosaic_0001>
module attributes {stable_mosaic.version = 11 : i64} {
  func.func @kernel(%arg0: i32, %arg1: i32, %arg2: memref<1x4x256xbf16, #tpu.memory_space<vmem>>, %arg3: memref<1x8x64xbf16, #tpu.memory_space<vmem>>, %arg4: memref<1x16x16xbf16, #tpu.memory_space<vmem>>, %arg5: memref<1x16x4xbf16, #tpu.memory_space<vmem>>, %arg6: memref<256x256xbf16, #tpu.memory_space<vmem>>, %arg7: memref<64x256xbf16, #tpu.memory_space<vmem>>, %arg8: memref<16x256xbf16, #tpu.memory_space<vmem>>, %arg9: memref<4x256xbf16, #tpu.memory_space<vmem>>, %arg10: memref<32x4xbf16, #tpu.memory_space<vmem>>, %arg11: memref<32x8xbf16, #tpu.memory_space<vmem>>, %arg12: memref<32x16xbf16, #tpu.memory_space<vmem>>, %arg13: memref<32x16xbf16, #tpu.memory_space<vmem>>, %arg14: memref<4x32x1xf32, #tpu.memory_space<vmem>>, %arg15: memref<4x32x32xbf16, #tpu.memory_space<vmem>>, %arg16: memref<32x1xf32, #tpu.memory_space<vmem>>, %arg17: memref<1x32x256xf32, #tpu.memory_space<vmem>>) attributes {dimension_semantics = [#tpu.dimension_semantics<parallel>, #tpu.dimension_semantics<parallel>], iteration_bounds = array<i64: 2, 1>, scalar_prefetch = 0 : i64, scratch_operands = 0 : i64, tpu.core_type = #tpu.core_type<tc>, window_params = [{transform_indices = @transform_0, window_bounds = array<i64: 1, 4, 256>}, {transform_indices = @transform_1, window_bounds = array<i64: 1, 8, 64>}, {transform_indices = @transform_2, window_bounds = array<i64: 1, 16, 16>}, {transform_indices = @transform_3, window_bounds = array<i64: 1, 16, 4>}, {transform_indices = @transform_4, window_bounds = array<i64: 256, 256>}, {transform_indices = @transform_5, window_bounds = array<i64: 64, 256>}, {transform_indices = @transform_6, window_bounds = array<i64: 16, 256>}, {transform_indices = @transform_7, window_bounds = array<i64: 4, 256>}, {pipeline_mode = #tpu.pipeline_mode<synchronous>, transform_indices = @transform_8, window_bounds = array<i64: 32, 4>}, {pipeline_mode = #tpu.pipeline_mode<synchronous>, transform_indices = @transform_9, window_bounds = array<i64: 32, 8>}, {pipeline_mode = #tpu.pipeline_mode<synchronous>, transform_indices = @transform_10, window_bounds = array<i64: 32, 16>}, {pipeline_mode = #tpu.pipeline_mode<synchronous>, transform_indices = @transform_11, window_bounds = array<i64: 32, 16>}, {pipeline_mode = #tpu.pipeline_mode<synchronous>, transform_indices = @transform_12, window_bounds = array<i64: 4, 32, 1>}, {pipeline_mode = #tpu.pipeline_mode<synchronous>, transform_indices = @transform_13, window_bounds = array<i64: 4, 32, 32>}, {pipeline_mode = #tpu.pipeline_mode<synchronous>, transform_indices = @transform_14, window_bounds = array<i64: 32, 1>}, {transform_indices = @transform_15, window_bounds = array<i64: 1, 32, 256>}]} {
    %c0 = arith.constant 0 : index
    %c0_0 = arith.constant 0 : index
    %c0_1 = arith.constant 0 : index
    %0 = vector.load %arg2[%c0, %c0_0, %c0_1] : memref<1x4x256xbf16, #tpu.memory_space<vmem>>, vector<1x4x256xbf16>
    %1 = vector.shape_cast %0 : vector<1x4x256xbf16> to vector<4x256xbf16>
    %c0_2 = arith.constant 0 : index
    %c0_3 = arith.constant 0 : index
    %2 = vector.load %arg10[%c0_2, %c0_3] : memref<32x4xbf16, #tpu.memory_space<vmem>>, vector<32x4xbf16>
    %c0_4 = arith.constant 0 : index
    %c0_5 = arith.constant 0 : index
    %3 = vector.load %arg6[%c0_4, %c0_5] : memref<256x256xbf16, #tpu.memory_space<vmem>>, vector<256x256xbf16>
    %cst = arith.constant dense<0.000000e+00> : vector<32x256xf32>
    %4 = tpu.matmul %2, %1, %cst {dimension_numbers = #tpu.dot_dimension_numbers<[1], [0], [0], [1], [0, 0, 1, 1], [], []>} : vector<32x4xbf16>, vector<4x256xbf16>, vector<32x256xf32> -> vector<32x256xf32>
    %c0_6 = arith.constant 0 : index
    %c0_7 = arith.constant 0 : index
    %c0_8 = arith.constant 0 : index
    %5 = vector.load %arg14[%c0_6, %c0_7, %c0_8] : memref<4x32x1xf32, #tpu.memory_space<vmem>>, vector<1x32x1xf32>
    %6 = vector.shape_cast %5 : vector<1x32x1xf32> to vector<32x1xf32>
    %7 = vector.broadcast %6 : vector<32x1xf32> to vector<32x256xf32>
    %8 = arith.addf %4, %7 : vector<32x256xf32>
    %cst_9 = arith.constant 0.000000e+00 : f32
    %9 = vector.broadcast %cst_9 : f32 to vector<32x256xf32>
    %10 = arith.maximumf %8, %9 : vector<32x256xf32>
    %11 = arith.truncf %10 : vector<32x256xf32> to vector<32x256xbf16>
    %cst_10 = arith.constant dense<0.000000e+00> : vector<32x256xf32>
    %12 = tpu.matmul %11, %3, %cst_10 {dimension_numbers = #tpu.dot_dimension_numbers<[1], [0], [0], [1], [0, 0, 1, 1], [], []>} : vector<32x256xbf16>, vector<256x256xbf16>, vector<32x256xf32> -> vector<32x256xf32>
    %13 = arith.truncf %12 : vector<32x256xf32> to vector<32x256xbf16>
    %c0_11 = arith.constant 0 : index
    %c0_12 = arith.constant 0 : index
    %c0_13 = arith.constant 0 : index
    %14 = vector.load %arg15[%c0_11, %c0_12, %c0_13] : memref<4x32x32xbf16, #tpu.memory_space<vmem>>, vector<1x32x32xbf16>
    %15 = vector.shape_cast %14 : vector<1x32x32xbf16> to vector<32x32xbf16>
    %cst_14 = arith.constant dense<0.000000e+00> : vector<32x256xf32>
    %16 = tpu.matmul %15, %13, %cst_14 {dimension_numbers = #tpu.dot_dimension_numbers<[1], [0], [0], [1], [0, 0, 1, 1], [], []>} : vector<32x32xbf16>, vector<32x256xbf16>, vector<32x256xf32> -> vector<32x256xf32>
    %c0_15 = arith.constant 0 : index
    %c0_16 = arith.constant 0 : index
    %c0_17 = arith.constant 0 : index
    %17 = vector.load %arg3[%c0_15, %c0_16, %c0_17] : memref<1x8x64xbf16, #tpu.memory_space<vmem>>, vector<1x8x64xbf16>
    %18 = vector.shape_cast %17 : vector<1x8x64xbf16> to vector<8x64xbf16>
    %c0_18 = arith.constant 0 : index
    %c0_19 = arith.constant 0 : index
    %19 = vector.load %arg11[%c0_18, %c0_19] : memref<32x8xbf16, #tpu.memory_space<vmem>>, vector<32x8xbf16>
    %c0_20 = arith.constant 0 : index
    %c0_21 = arith.constant 0 : index
    %20 = vector.load %arg7[%c0_20, %c0_21] : memref<64x256xbf16, #tpu.memory_space<vmem>>, vector<64x256xbf16>
    %cst_22 = arith.constant dense<0.000000e+00> : vector<32x64xf32>
    %21 = tpu.matmul %19, %18, %cst_22 {dimension_numbers = #tpu.dot_dimension_numbers<[1], [0], [0], [1], [0, 0, 1, 1], [], []>} : vector<32x8xbf16>, vector<8x64xbf16>, vector<32x64xf32> -> vector<32x64xf32>
    %c1 = arith.constant 1 : index
    %c0_23 = arith.constant 0 : index
    %c0_24 = arith.constant 0 : index
    %22 = vector.load %arg14[%c1, %c0_23, %c0_24] : memref<4x32x1xf32, #tpu.memory_space<vmem>>, vector<1x32x1xf32>
    %23 = vector.shape_cast %22 : vector<1x32x1xf32> to vector<32x1xf32>
    %24 = vector.broadcast %23 : vector<32x1xf32> to vector<32x64xf32>
    %25 = arith.addf %21, %24 : vector<32x64xf32>
    %cst_25 = arith.constant 0.000000e+00 : f32
    %26 = vector.broadcast %cst_25 : f32 to vector<32x64xf32>
    %27 = arith.maximumf %25, %26 : vector<32x64xf32>
    %28 = arith.truncf %27 : vector<32x64xf32> to vector<32x64xbf16>
    %cst_26 = arith.constant dense<0.000000e+00> : vector<32x256xf32>
    %29 = tpu.matmul %28, %20, %cst_26 {dimension_numbers = #tpu.dot_dimension_numbers<[1], [0], [0], [1], [0, 0, 1, 1], [], []>} : vector<32x64xbf16>, vector<64x256xbf16>, vector<32x256xf32> -> vector<32x256xf32>
    %30 = arith.truncf %29 : vector<32x256xf32> to vector<32x256xbf16>
    %c1_27 = arith.constant 1 : index
    %c0_28 = arith.constant 0 : index
    %c0_29 = arith.constant 0 : index
    %31 = vector.load %arg15[%c1_27, %c0_28, %c0_29] : memref<4x32x32xbf16, #tpu.memory_space<vmem>>, vector<1x32x32xbf16>
    %32 = vector.shape_cast %31 : vector<1x32x32xbf16> to vector<32x32xbf16>
    %cst_30 = arith.constant dense<0.000000e+00> : vector<32x256xf32>
    %33 = tpu.matmul %32, %30, %cst_30 {dimension_numbers = #tpu.dot_dimension_numbers<[1], [0], [0], [1], [0, 0, 1, 1], [], []>} : vector<32x32xbf16>, vector<32x256xbf16>, vector<32x256xf32> -> vector<32x256xf32>
    %34 = arith.addf %16, %33 : vector<32x256xf32>
    %c0_31 = arith.constant 0 : index
    %c0_32 = arith.constant 0 : index
    %c0_33 = arith.constant 0 : index
    %35 = vector.load %arg4[%c0_31, %c0_32, %c0_33] : memref<1x16x16xbf16, #tpu.memory_space<vmem>>, vector<1x16x16xbf16>
    %36 = vector.shape_cast %35 : vector<1x16x16xbf16> to vector<16x16xbf16>
    %c0_34 = arith.constant 0 : index
    %c0_35 = arith.constant 0 : index
    %37 = vector.load %arg12[%c0_34, %c0_35] : memref<32x16xbf16, #tpu.memory_space<vmem>>, vector<32x16xbf16>
    %c0_36 = arith.constant 0 : index
    %c0_37 = arith.constant 0 : index
    %38 = vector.load %arg8[%c0_36, %c0_37] : memref<16x256xbf16, #tpu.memory_space<vmem>>, vector<16x256xbf16>
    %cst_38 = arith.constant dense<0.000000e+00> : vector<32x16xf32>
    %39 = tpu.matmul %37, %36, %cst_38 {dimension_numbers = #tpu.dot_dimension_numbers<[1], [0], [0], [1], [0, 0, 1, 1], [], []>} : vector<32x16xbf16>, vector<16x16xbf16>, vector<32x16xf32> -> vector<32x16xf32>
    %c2 = arith.constant 2 : index
    %c0_39 = arith.constant 0 : index
    %c0_40 = arith.constant 0 : index
    %40 = vector.load %arg14[%c2, %c0_39, %c0_40] : memref<4x32x1xf32, #tpu.memory_space<vmem>>, vector<1x32x1xf32>
    %41 = vector.shape_cast %40 : vector<1x32x1xf32> to vector<32x1xf32>
    %42 = vector.broadcast %41 : vector<32x1xf32> to vector<32x16xf32>
    %43 = arith.addf %39, %42 : vector<32x16xf32>
    %cst_41 = arith.constant 0.000000e+00 : f32
    %44 = vector.broadcast %cst_41 : f32 to vector<32x16xf32>
    %45 = arith.maximumf %43, %44 : vector<32x16xf32>
    %46 = arith.truncf %45 : vector<32x16xf32> to vector<32x16xbf16>
    %cst_42 = arith.constant dense<0.000000e+00> : vector<32x256xf32>
    %47 = tpu.matmul %46, %38, %cst_42 {dimension_numbers = #tpu.dot_dimension_numbers<[1], [0], [0], [1], [0, 0, 1, 1], [], []>} : vector<32x16xbf16>, vector<16x256xbf16>, vector<32x256xf32> -> vector<32x256xf32>
    %48 = arith.truncf %47 : vector<32x256xf32> to vector<32x256xbf16>
    %c2_43 = arith.constant 2 : index
    %c0_44 = arith.constant 0 : index
    %c0_45 = arith.constant 0 : index
    %49 = vector.load %arg15[%c2_43, %c0_44, %c0_45] : memref<4x32x32xbf16, #tpu.memory_space<vmem>>, vector<1x32x32xbf16>
    %50 = vector.shape_cast %49 : vector<1x32x32xbf16> to vector<32x32xbf16>
    %cst_46 = arith.constant dense<0.000000e+00> : vector<32x256xf32>
    %51 = tpu.matmul %50, %48, %cst_46 {dimension_numbers = #tpu.dot_dimension_numbers<[1], [0], [0], [1], [0, 0, 1, 1], [], []>} : vector<32x32xbf16>, vector<32x256xbf16>, vector<32x256xf32> -> vector<32x256xf32>
    %52 = arith.addf %34, %51 : vector<32x256xf32>
    %c0_47 = arith.constant 0 : index
    %c0_48 = arith.constant 0 : index
    %c0_49 = arith.constant 0 : index
    %53 = vector.load %arg5[%c0_47, %c0_48, %c0_49] : memref<1x16x4xbf16, #tpu.memory_space<vmem>>, vector<1x16x4xbf16>
    %54 = vector.shape_cast %53 : vector<1x16x4xbf16> to vector<16x4xbf16>
    %c0_50 = arith.constant 0 : index
    %c0_51 = arith.constant 0 : index
    %55 = vector.load %arg13[%c0_50, %c0_51] : memref<32x16xbf16, #tpu.memory_space<vmem>>, vector<32x16xbf16>
    %c0_52 = arith.constant 0 : index
    %c0_53 = arith.constant 0 : index
    %56 = vector.load %arg9[%c0_52, %c0_53] : memref<4x256xbf16, #tpu.memory_space<vmem>>, vector<4x256xbf16>
    %cst_54 = arith.constant dense<0.000000e+00> : vector<32x4xf32>
    %57 = tpu.matmul %55, %54, %cst_54 {dimension_numbers = #tpu.dot_dimension_numbers<[1], [0], [0], [1], [0, 0, 1, 1], [], []>} : vector<32x16xbf16>, vector<16x4xbf16>, vector<32x4xf32> -> vector<32x4xf32>
    %c3 = arith.constant 3 : index
    %c0_55 = arith.constant 0 : index
    %c0_56 = arith.constant 0 : index
    %58 = vector.load %arg14[%c3, %c0_55, %c0_56] : memref<4x32x1xf32, #tpu.memory_space<vmem>>, vector<1x32x1xf32>
    %59 = vector.shape_cast %58 : vector<1x32x1xf32> to vector<32x1xf32>
    %60 = vector.broadcast %59 : vector<32x1xf32> to vector<32x4xf32>
    %61 = arith.addf %57, %60 : vector<32x4xf32>
    %cst_57 = arith.constant 0.000000e+00 : f32
    %62 = vector.broadcast %cst_57 : f32 to vector<32x4xf32>
    %63 = arith.maximumf %61, %62 : vector<32x4xf32>
    %64 = arith.truncf %63 : vector<32x4xf32> to vector<32x4xbf16>
    %cst_58 = arith.constant dense<0.000000e+00> : vector<32x256xf32>
    %65 = tpu.matmul %64, %56, %cst_58 {dimension_numbers = #tpu.dot_dimension_numbers<[1], [0], [0], [1], [0, 0, 1, 1], [], []>} : vector<32x4xbf16>, vector<4x256xbf16>, vector<32x256xf32> -> vector<32x256xf32>
    %66 = arith.truncf %65 : vector<32x256xf32> to vector<32x256xbf16>
    %c3_59 = arith.constant 3 : index
    %c0_60 = arith.constant 0 : index
    %c0_61 = arith.constant 0 : index
    %67 = vector.load %arg15[%c3_59, %c0_60, %c0_61] : memref<4x32x32xbf16, #tpu.memory_space<vmem>>, vector<1x32x32xbf16>
    %68 = vector.shape_cast %67 : vector<1x32x32xbf16> to vector<32x32xbf16>
    %cst_62 = arith.constant dense<0.000000e+00> : vector<32x256xf32>
    %69 = tpu.matmul %68, %66, %cst_62 {dimension_numbers = #tpu.dot_dimension_numbers<[1], [0], [0], [1], [0, 0, 1, 1], [], []>} : vector<32x32xbf16>, vector<32x256xbf16>, vector<32x256xf32> -> vector<32x256xf32>
    %70 = arith.addf %52, %69 : vector<32x256xf32>
    %c0_63 = arith.constant 0 : index
    %c0_64 = arith.constant 0 : index
    %71 = vector.load %arg16[%c0_63, %c0_64] : memref<32x1xf32, #tpu.memory_space<vmem>>, vector<32x1xf32>
    %72 = vector.broadcast %71 : vector<32x1xf32> to vector<32x256xf32>
    %73 = arith.addf %70, %72 : vector<32x256xf32>
    %cst_65 = arith.constant 0.000000e+00 : f32
    %74 = vector.broadcast %cst_65 : f32 to vector<32x256xf32>
    %75 = arith.maximumf %73, %74 : vector<32x256xf32>
    %c0_66 = arith.constant 0 : index
    %c0_67 = arith.constant 0 : index
    %c0_68 = arith.constant 0 : index
    %76 = vector.load %arg17[%c0_66, %c0_67, %c0_68] : memref<1x32x256xf32, #tpu.memory_space<vmem>>, vector<1x32x256xf32>
    %77 = vector.shape_cast %76 : vector<1x32x256xf32> to vector<32x256xf32>
    %78 = vector.shape_cast %75 : vector<32x256xf32> to vector<1x32x256xf32>
    tpu.vector_store %arg17[%c0_66, %c0_67, %c0_68], %78 {strides = array<i32>} : memref<1x32x256xf32, #tpu.memory_space<vmem>>, vector<1x32x256xf32>,
    return
  }
  func.func @transform_0(%arg0: i32, %arg1: i32) -> (i32, i32, i32) {
    %c0_i32 = arith.constant 0 : i32
    %c0_i32_0 = arith.constant 0 : i32
    %c0_i32_1 = arith.constant 0 : i32
    return %arg0, %c0_i32, %c0_i32_0 : i32, i32, i32
  }
  func.func @transform_1(%arg0: i32, %arg1: i32) -> (i32, i32, i32) {
    %c0_i32 = arith.constant 0 : i32
    %c0_i32_0 = arith.constant 0 : i32
    %c0_i32_1 = arith.constant 0 : i32
    return %arg0, %c0_i32, %c0_i32_0 : i32, i32, i32
  }
  func.func @transform_2(%arg0: i32, %arg1: i32) -> (i32, i32, i32) {
    %c0_i32 = arith.constant 0 : i32
    %c0_i32_0 = arith.constant 0 : i32
    %c0_i32_1 = arith.constant 0 : i32
    return %arg0, %c0_i32, %c0_i32_0 : i32, i32, i32
  }
  func.func @transform_3(%arg0: i32, %arg1: i32) -> (i32, i32, i32) {
    %c0_i32 = arith.constant 0 : i32
    %c0_i32_0 = arith.constant 0 : i32
    %c0_i32_1 = arith.constant 0 : i32
    return %arg0, %c0_i32, %c0_i32_0 : i32, i32, i32
  }
  func.func @transform_4(%arg0: i32, %arg1: i32) -> (i32, i32) {
    %c0_i32 = arith.constant 0 : i32
    %c0_i32_0 = arith.constant 0 : i32
    return %c0_i32, %arg1 : i32, i32
  }
  func.func @transform_5(%arg0: i32, %arg1: i32) -> (i32, i32) {
    %c0_i32 = arith.constant 0 : i32
    %c0_i32_0 = arith.constant 0 : i32
    return %c0_i32, %arg1 : i32, i32
  }
  func.func @transform_6(%arg0: i32, %arg1: i32) -> (i32, i32) {
    %c0_i32 = arith.constant 0 : i32
    %c0_i32_0 = arith.constant 0 : i32
    return %c0_i32, %arg1 : i32, i32
  }
  func.func @transform_7(%arg0: i32, %arg1: i32) -> (i32, i32) {
    %c0_i32 = arith.constant 0 : i32
    %c0_i32_0 = arith.constant 0 : i32
    return %c0_i32, %arg1 : i32, i32
  }
  func.func @transform_8(%arg0: i32, %arg1: i32) -> (i32, i32) {
    %c0_i32 = arith.constant 0 : i32
    %c0_i32_0 = arith.constant 0 : i32
    %c0_i32_1 = arith.constant 0 : i32
    return %c0_i32, %c0_i32_0 : i32, i32
  }
  func.func @transform_9(%arg0: i32, %arg1: i32) -> (i32, i32) {
    %c0_i32 = arith.constant 0 : i32
    %c0_i32_0 = arith.constant 0 : i32
    %c0_i32_1 = arith.constant 0 : i32
    return %c0_i32, %c0_i32_0 : i32, i32
  }
  func.func @transform_10(%arg0: i32, %arg1: i32) -> (i32, i32) {
    %c0_i32 = arith.constant 0 : i32
    %c0_i32_0 = arith.constant 0 : i32
    %c0_i32_1 = arith.constant 0 : i32
    return %c0_i32, %c0_i32_0 : i32, i32
  }
  func.func @transform_11(%arg0: i32, %arg1: i32) -> (i32, i32) {
    %c0_i32 = arith.constant 0 : i32
    %c0_i32_0 = arith.constant 0 : i32
    %c0_i32_1 = arith.constant 0 : i32
    return %c0_i32, %c0_i32_0 : i32, i32
  }
  func.func @transform_12(%arg0: i32, %arg1: i32) -> (i32, i32, i32) {
    %c0_i32 = arith.constant 0 : i32
    %c0_i32_0 = arith.constant 0 : i32
    %c0_i32_1 = arith.constant 0 : i32
    %c0_i32_2 = arith.constant 0 : i32
    return %c0_i32, %c0_i32_0, %c0_i32_1 : i32, i32, i32
  }
  func.func @transform_13(%arg0: i32, %arg1: i32) -> (i32, i32, i32) {
    %c0_i32 = arith.constant 0 : i32
    %c0_i32_0 = arith.constant 0 : i32
    %c0_i32_1 = arith.constant 0 : i32
    %c0_i32_2 = arith.constant 0 : i32
    return %c0_i32, %c0_i32_0, %c0_i32_1 : i32, i32, i32
  }
  func.func @transform_14(%arg0: i32, %arg1: i32) -> (i32, i32) {
    %c0_i32 = arith.constant 0 : i32
    %c0_i32_0 = arith.constant 0 : i32
    %c0_i32_1 = arith.constant 0 : i32
    return %c0_i32, %c0_i32_0 : i32, i32
  }
  func.func @transform_15(%arg0: i32, %arg1: i32) -> (i32, i32, i32) {
    %c0_i32 = arith.constant 0 : i32
    %c0_i32_0 = arith.constant 0 : i32
    return %arg0, %c0_i32, %arg1 : i32, i32, i32
  }
}

</mosaic_0001>

<llo_original>
// kernel: tpu_custom_call.1
$region0: #{tpu_custom_call.1}
  #allocation0 [shape = 'u32[]', space=smem, size = 0x4, offset = 0x4, fixed_abs, tag = 'smem constant byte address 0x4 - core index']
  #allocation1 [shape = 'u32[144,128]{1,0:T(1,128)}', space=vmem, size = 0x12000, scoped, tag = 'internal scratch']
  %s0 = inlined_call_operand.hbm [shape: bf16[2,4,256], index: 0, kind: input, shape index: {}]
  %s1 = inlined_call_operand.hbm [shape: bf16[2,8,64], index: 1, kind: input, shape index: {}]
  %s2 = inlined_call_operand.hbm [shape: bf16[2,16,16], index: 2, kind: input, shape index: {}]
  %s3 = inlined_call_operand.vmem [shape: bf16[2,16,4], index: 3, kind: input, shape index: {}]
  %s4 = inlined_call_operand.vmem [shape: bf16[256,256], index: 4, kind: input, shape index: {}]
  %s5 = inlined_call_operand.hbm [shape: bf16[64,256], index: 5, kind: input, shape index: {}]
  %s6 = inlined_call_operand.hbm [shape: bf16[16,256], index: 6, kind: input, shape index: {}]
  %s7 = inlined_call_operand.hbm [shape: bf16[4,256], index: 7, kind: input, shape index: {}]
  %s8 = inlined_call_operand.vmem [shape: bf16[32,4], index: 8, kind: input, shape index: {}]
  %s9 = inlined_call_operand.vmem [shape: bf16[32,8], index: 9, kind: input, shape index: {}]
  %s10 = inlined_call_operand.vmem [shape: bf16[32,16], index: 10, kind: input, shape index: {}]
  %s11 = inlined_call_operand.vmem [shape: bf16[32,16], index: 11, kind: input, shape index: {}]
  %s12 = inlined_call_operand.vmem [shape: f32[4,32,1], index: 12, kind: input, shape index: {}]
  %s13 = inlined_call_operand.vmem [shape: bf16[4,32,32], index: 13, kind: input, shape index: {}]
  %s14 = inlined_call_operand.vmem [shape: f32[32,1], index: 14, kind: input, shape index: {}]
  %s15 = inlined_call_operand.hbm [shape: f32[2,32,256], index: 15, kind: output, shape index: {}]
  %s16 = sld [smem:[#allocation0]]
  $region117: #{tpu_custom_call.1} parent=0
    _
  %s18 = ssub.s32 1, %s16
  %s19 = scalar_select 0, %s18, %s16
  $region1: #{tpu_custom_call.1} parent=0
    #allocation2 [shape = 'u8[4096]{0}', space=vmem, size = 0x1000, scoped, tag = 'input window, operand 0']
    #allocation3 [shape = 's32[2]{0}', space=sflag, size = 0x8, scoped, tag = 'scoped memory for tpu_custom_call.1']
    #allocation4 [shape = 's32[2]{0}', space=sflag, size = 0x8, scoped, tag = 'scoped memory for tpu_custom_call.1']
    #allocation5 [shape = 'u8[4096]{0}', space=vmem, size = 0x1000, scoped, tag = 'input window, operand 1']
    #allocation6 [shape = 's32[2]{0}', space=sflag, size = 0x8, scoped, tag = 'scoped memory for tpu_custom_call.1']
    #allocation7 [shape = 'u8[8192]{0}', space=vmem, size = 0x2000, scoped, tag = 'input window, operand 2']
    #allocation8 [shape = 'u8[32768]{0}', space=vmem, size = 0x8000, scoped, tag = 'input window, operand 5, single buffered']
    #allocation9 [shape = 's32[1]{0}', space=sflag, size = 0x4, scoped, tag = 'scoped memory for tpu_custom_call.1']
    #allocation10 [shape = 'u8[8192]{0}', space=vmem, size = 0x2000, scoped, tag = 'input window, operand 6, single buffered']
    #allocation11 [shape = 'u8[2048]{0}', space=vmem, size = 0x800, scoped, tag = 'input window, operand 7, single buffered']
    #allocation12 [shape = 's32[1]{0}', space=sflag, size = 0x4, scoped, tag = 'scoped memory for tpu_custom_call.1']
    #allocation13 [shape = 'u8[65536]{0}', space=vmem, size = 0x10000, scoped, tag = 'output window, operand 0']
    %20 = vsyncpa [#allocation3], 0
    %s21 = scalar_lea.sflag [#allocation3], 1
    %22 = vsyncpa %s21, 0
    %23 = vsyncpa [#allocation6], 0
    %s24 = scalar_lea.sflag [#allocation6], 1
    %25 = vsyncpa %s24, 0
    %26 = vsyncpa [#allocation9], 0
    %27 = vsyncpa [#allocation12], 0
    %28 = vsyncpa [#allocation4], 0
    %s29 = scalar_lea.sflag [#allocation4], 1
    %30 = vsyncpa %s29, 0
    loop: start=0, step=1, limit=4
    $region2: #{tpu_custom_call.1} parent=1 // loop_pre_header
      _
    $region3: #{tpu_custom_call.1} parent=1 // loop_header
      %s32 = sphi 0, %s36
      %p33 = scmp.ge.s32.totalorder %s32, 4
      %s39 = sphi 0, %s51
      %s40 = sphi 0, %s47
      %s41 = sphi 0, %s39
      %s42 = sphi 0, %s40
      %s43 = sphi 0, %s41
      %s44 = sphi 0, %s42
      %s54 = sphi 0, %s56
      %s57 = sphi 0, %s54
      %s58 = sphi 0, %s57
      %s74 = sphi 0, %s58
      %s80 = sphi 0, %s82
      %s83 = sphi 0, %s80
      %s84 = sphi 0, %s83
      %s100 = sphi 0, %s84
      %s106 = sphi 0, %s108
      %s109 = sphi 0, %s106
      %s110 = sphi 0, %s109
      %s126 = sphi 0, %s110
      %s132 = sphi 0, %s134
      %s135 = sphi 0, %s132
      %s136 = sphi 0, %s135
      %s152 = sphi 0, %s136
      %s158 = sphi 0, %s160
      %s161 = sphi 0, %s158
      %s162 = sphi 0, %s161
      %s178 = sphi 0, %s162
      %s184 = sphi 0, %s186
      %s187 = sphi 0, %s184
      %s188 = sphi 0, %s187
      %s204 = sphi 0, %s188
      %s210 = sphi 0, %s212
      %s213 = sphi 0, %s210
      %s214 = sphi 0, %s213
      %s230 = sphi 0, %s214
      %s236 = sphi 0, %s238
      %s239 = sphi 0, %s236
      %s240 = sphi 0, %s239
      %s256 = sphi 0, %s240
      %s260 = sphi 0, %s260
      %s262 = sphi 0, %s260
      %s263 = sphi 0, %s262
      %s277 = sphi 0, %s263
      %s281 = sphi 0, %s281
      %s283 = sphi 0, %s281
      %s284 = sphi 0, %s283
      %s298 = sphi 0, %s284
      %s302 = sphi 0, %s302
      %s304 = sphi 0, %s302
      %s305 = sphi 0, %s304
      %s319 = sphi 0, %s305
      %s323 = sphi 0, %s323
      %s325 = sphi 0, %s323
      %s326 = sphi 0, %s325
      %s340 = sphi 0, %s326
      %s344 = sphi 0, %s344
      %s346 = sphi 0, %s344
      %s347 = sphi 0, %s346
      %s361 = sphi 0, %s347
      %s365 = sphi 0, %s365
      %s367 = sphi 0, %s365
      %s368 = sphi 0, %s367
      %s382 = sphi 0, %s368
      %s386 = sphi 0, %s386
      %s388 = sphi 0, %s386
      %s389 = sphi 0, %s388
      %s403 = sphi 0, %s389
      %s411 = sphi 0, %s413
      %s414 = sphi 0, %s411
      %s415 = sphi 0, %s414
      %s431 = sphi 0, %s415
    $region4: #{tpu_custom_call.1} parent=1 // loop_header_branch
      %35 = sbr.rel (%p33) target = $region8
    $region5: #{tpu_custom_call.1} parent=1 // loop_body
      %s37 = ssub.s32 %s32, 1
      %s38 = ssub.s32 %s32, 2
      %s45 = sadd.s32 1, %s40
      %p46 = scmp.ge.s32.totalorder %s45, 1
      %s47 = scalar_select %p46, 0, %s45
      %s48 = sadd.s32 1, %s39
      %s49 = scalar_select %p46, %s48, %s39
      %p50 = scmp.ge.s32.totalorder %s49, 2
      %s51 = scalar_select %p50, 0, %s49
      %s52 = ssub.s32 %s39, %s51
      %p53 = scmp.eq.s32.totalorder %s52, 0
      %s55 = sadd.s32 %s54, 1
      %s56 = scalar_select %p53, %s54, %s55
      %p59 = pneg %p53
      %p60 = scmp.eq.s32.totalorder %s32, 1
      %p61 = por %p59, %p60
      %p62 = scmp.ne.s32.totalorder %s54, %s57
      %p63 = scmp.eq.s32.totalorder %s32, 0
      %p64 = por %p62, %p63
      %p65 = scmp.ne.s32.totalorder %s54, %s57
      %p66 = scmp.eq.s32.totalorder %s37, 1
      %p67 = por %p65, %p66
      %p68 = scmp.ne.s32.totalorder %s57, %s58
      %p69 = scmp.eq.s32.totalorder %s37, 0
      %p70 = por %p68, %p69
      %p71 = scmp.ne.s32.totalorder %s57, %s58
      %p72 = scmp.eq.s32.totalorder %s38, 1
      %p73 = por %p71, %p72
      %p75 = scmp.ne.s32.totalorder %s58, %s74
      %p76 = scmp.eq.s32.totalorder %s38, 0
      %p77 = por %p75, %p76
      %s78 = ssub.s32 %s39, %s51
      %p79 = scmp.eq.s32.totalorder %s78, 0
      %s81 = sadd.s32 %s80, 1
      %s82 = scalar_select %p79, %s80, %s81
      %p85 = pneg %p79
      %p86 = scmp.eq.s32.totalorder %s32, 1
      %p87 = por %p85, %p86
      %p88 = scmp.ne.s32.totalorder %s80, %s83
      %p89 = scmp.eq.s32.totalorder %s32, 0
      %p90 = por %p88, %p89
      %p91 = scmp.ne.s32.totalorder %s80, %s83
      %p92 = scmp.eq.s32.totalorder %s37, 1
      %p93 = por %p91, %p92
      %p94 = scmp.ne.s32.totalorder %s83, %s84
      %p95 = scmp.eq.s32.totalorder %s37, 0
      %p96 = por %p94, %p95
      %p97 = scmp.ne.s32.totalorder %s83, %s84
      %p98 = scmp.eq.s32.totalorder %s38, 1
      %p99 = por %p97, %p98
      %p101 = scmp.ne.s32.totalorder %s84, %s100
      %p102 = scmp.eq.s32.totalorder %s38, 0
      %p103 = por %p101, %p102
      %s104 = ssub.s32 %s39, %s51
      %p105 = scmp.eq.s32.totalorder %s104, 0
      %s107 = sadd.s32 %s106, 1
      %s108 = scalar_select %p105, %s106, %s107
      %p111 = pneg %p105
      %p112 = scmp.eq.s32.totalorder %s32, 1
      %p113 = por %p111, %p112
      %p114 = scmp.ne.s32.totalorder %s106, %s109
      %p115 = scmp.eq.s32.totalorder %s32, 0
      %p116 = por %p114, %p115
      %p117 = scmp.ne.s32.totalorder %s106, %s109
      %p118 = scmp.eq.s32.totalorder %s37, 1
      %p119 = por %p117, %p118
      %p120 = scmp.ne.s32.totalorder %s109, %s110
      %p121 = scmp.eq.s32.totalorder %s37, 0
      %p122 = por %p120, %p121
      %p123 = scmp.ne.s32.totalorder %s109, %s110
      %p124 = scmp.eq.s32.totalorder %s38, 1
      %p125 = por %p123, %p124
      %p127 = scmp.ne.s32.totalorder %s110, %s126
      %p128 = scmp.eq.s32.totalorder %s38, 0
      %p129 = por %p127, %p128
      %s130 = ssub.s32 %s39, %s51
      %p131 = scmp.eq.s32.totalorder %s130, 0
      %s133 = sadd.s32 %s132, 1
      %s134 = scalar_select %p131, %s132, %s133
      %p137 = pneg %p131
      %p138 = scmp.eq.s32.totalorder %s32, 1
      %p139 = por %p137, %p138
      %p140 = scmp.ne.s32.totalorder %s132, %s135
      %p141 = scmp.eq.s32.totalorder %s32, 0
      %p142 = por %p140, %p141
      %p143 = scmp.ne.s32.totalorder %s132, %s135
      %p144 = scmp.eq.s32.totalorder %s37, 1
      %p145 = por %p143, %p144
      %p146 = scmp.ne.s32.totalorder %s135, %s136
      %p147 = scmp.eq.s32.totalorder %s37, 0
      %p148 = por %p146, %p147
      %p149 = scmp.ne.s32.totalorder %s135, %s136
      %p150 = scmp.eq.s32.totalorder %s38, 1
      %p151 = por %p149, %p150
      %p153 = scmp.ne.s32.totalorder %s136, %s152
      %p154 = scmp.eq.s32.totalorder %s38, 0
      %p155 = por %p153, %p154
      %s156 = ssub.s32 %s40, %s47
      %p157 = scmp.eq.s32.totalorder %s156, 0
      %s159 = sadd.s32 %s158, 1
      %s160 = scalar_select %p157, %s158, %s159
      %p163 = pneg %p157
      %p164 = scmp.eq.s32.totalorder %s32, 1
      %p165 = por %p163, %p164
      %p166 = scmp.ne.s32.totalorder %s158, %s161
      %p167 = scmp.eq.s32.totalorder %s32, 0
      %p168 = por %p166, %p167
      %p169 = scmp.ne.s32.totalorder %s158, %s161
      %p170 = scmp.eq.s32.totalorder %s37, 1
      %p171 = por %p169, %p170
      %p172 = scmp.ne.s32.totalorder %s161, %s162
      %p173 = scmp.eq.s32.totalorder %s37, 0
      %p174 = por %p172, %p173
      %p175 = scmp.ne.s32.totalorder %s161, %s162
      %p176 = scmp.eq.s32.totalorder %s38, 1
      %p177 = por %p175, %p176
      %p179 = scmp.ne.s32.totalorder %s162, %s178
      %p180 = scmp.eq.s32.totalorder %s38, 0
      %p181 = por %p179, %p180
      %s182 = ssub.s32 %s40, %s47
      %p183 = scmp.eq.s32.totalorder %s182, 0
      %s185 = sadd.s32 %s184, 1
      %s186 = scalar_select %p183, %s184, %s185
      %p189 = pneg %p183
      %p190 = scmp.eq.s32.totalorder %s32, 1
      %p191 = por %p189, %p190
      %p192 = scmp.ne.s32.totalorder %s184, %s187
      %p193 = scmp.eq.s32.totalorder %s32, 0
      %p194 = por %p192, %p193
      %p195 = scmp.ne.s32.totalorder %s184, %s187
      %p196 = scmp.eq.s32.totalorder %s37, 1
      %p197 = por %p195, %p196
      %p198 = scmp.ne.s32.totalorder %s187, %s188
      %p199 = scmp.eq.s32.totalorder %s37, 0
      %p200 = por %p198, %p199
      %p201 = scmp.ne.s32.totalorder %s187, %s188
      %p202 = scmp.eq.s32.totalorder %s38, 1
      %p203 = por %p201, %p202
      %p205 = scmp.ne.s32.totalorder %s188, %s204
      %p206 = scmp.eq.s32.totalorder %s38, 0
      %p207 = por %p205, %p206
      %s208 = ssub.s32 %s40, %s47
      %p209 = scmp.eq.s32.totalorder %s208, 0
      %s211 = sadd.s32 %s210, 1
      %s212 = scalar_select %p209, %s210, %s211
      %p215 = pneg %p209
      %p216 = scmp.eq.s32.totalorder %s32, 1
      %p217 = por %p215, %p216
      %p218 = scmp.ne.s32.totalorder %s210, %s213
      %p219 = scmp.eq.s32.totalorder %s32, 0
      %p220 = por %p218, %p219
      %p221 = scmp.ne.s32.totalorder %s210, %s213
      %p222 = scmp.eq.s32.totalorder %s37, 1
      %p223 = por %p221, %p222
      %p224 = scmp.ne.s32.totalorder %s213, %s214
      %p225 = scmp.eq.s32.totalorder %s37, 0
      %p226 = por %p224, %p225
      %p227 = scmp.ne.s32.totalorder %s213, %s214
      %p228 = scmp.eq.s32.totalorder %s38, 1
      %p229 = por %p227, %p228
      %p231 = scmp.ne.s32.totalorder %s214, %s230
      %p232 = scmp.eq.s32.totalorder %s38, 0
      %p233 = por %p231, %p232
      %s234 = ssub.s32 %s40, %s47
      %p235 = scmp.eq.s32.totalorder %s234, 0
      %s237 = sadd.s32 %s236, 1
      %s238 = scalar_select %p235, %s236, %s237
      %p241 = pneg %p235
      %p242 = scmp.eq.s32.totalorder %s32, 1
      %p243 = por %p241, %p242
      %p244 = scmp.ne.s32.totalorder %s236, %s239
      %p245 = scmp.eq.s32.totalorder %s32, 0
      %p246 = por %p244, %p245
      %p247 = scmp.ne.s32.totalorder %s236, %s239
      %p248 = scmp.eq.s32.totalorder %s37, 1
      %p249 = por %p247, %p248
      %p250 = scmp.ne.s32.totalorder %s239, %s240
      %p251 = scmp.eq.s32.totalorder %s37, 0
      %p252 = por %p250, %p251
      %p253 = scmp.ne.s32.totalorder %s239, %s240
      %p254 = scmp.eq.s32.totalorder %s38, 1
      %p255 = por %p253, %p254
      %p257 = scmp.ne.s32.totalorder %s240, %s256
      %p258 = scmp.eq.s32.totalorder %s38, 0
      %p259 = por %p257, %p258
      %s261 = sadd.s32 %s260, 1
      %p264 = scmp.eq.s32.totalorder %s32, 1
      %p265 = scmp.ne.s32.totalorder %s260, %s262
      %p266 = scmp.eq.s32.totalorder %s32, 0
      %p267 = por %p265, %p266
      %p268 = scmp.ne.s32.totalorder %s260, %s262
      %p269 = scmp.eq.s32.totalorder %s37, 1
      %p270 = por %p268, %p269
      %p271 = scmp.ne.s32.totalorder %s262, %s263
      %p272 = scmp.eq.s32.totalorder %s37, 0
      %p273 = por %p271, %p272
      %p274 = scmp.ne.s32.totalorder %s262, %s263
      %p275 = scmp.eq.s32.totalorder %s38, 1
      %p276 = por %p274, %p275
      %p278 = scmp.ne.s32.totalorder %s263, %s277
      %p279 = scmp.eq.s32.totalorder %s38, 0
      %p280 = por %p278, %p279
      %s282 = sadd.s32 %s281, 1
      %p285 = scmp.eq.s32.totalorder %s32, 1
      %p286 = scmp.ne.s32.totalorder %s281, %s283
      %p287 = scmp.eq.s32.totalorder %s32, 0
      %p288 = por %p286, %p287
      %p289 = scmp.ne.s32.totalorder %s281, %s283
      %p290 = scmp.eq.s32.totalorder %s37, 1
      %p291 = por %p289, %p290
      %p292 = scmp.ne.s32.totalorder %s283, %s284
      %p293 = scmp.eq.s32.totalorder %s37, 0
      %p294 = por %p292, %p293
      %p295 = scmp.ne.s32.totalorder %s283, %s284
      %p296 = scmp.eq.s32.totalorder %s38, 1
      %p297 = por %p295, %p296
      %p299 = scmp.ne.s32.totalorder %s284, %s298
      %p300 = scmp.eq.s32.totalorder %s38, 0
      %p301 = por %p299, %p300
      %s303 = sadd.s32 %s302, 1
      %p306 = scmp.eq.s32.totalorder %s32, 1
      %p307 = scmp.ne.s32.totalorder %s302, %s304
      %p308 = scmp.eq.s32.totalorder %s32, 0
      %p309 = por %p307, %p308
      %p310 = scmp.ne.s32.totalorder %s302, %s304
      %p311 = scmp.eq.s32.totalorder %s37, 1
      %p312 = por %p310, %p311
      %p313 = scmp.ne.s32.totalorder %s304, %s305
      %p314 = scmp.eq.s32.totalorder %s37, 0
      %p315 = por %p313, %p314
      %p316 = scmp.ne.s32.totalorder %s304, %s305
      %p317 = scmp.eq.s32.totalorder %s38, 1
      %p318 = por %p316, %p317
      %p320 = scmp.ne.s32.totalorder %s305, %s319
      %p321 = scmp.eq.s32.totalorder %s38, 0
      %p322 = por %p320, %p321
      %s324 = sadd.s32 %s323, 1
      %p327 = scmp.eq.s32.totalorder %s32, 1
      %p328 = scmp.ne.s32.totalorder %s323, %s325
      %p329 = scmp.eq.s32.totalorder %s32, 0
      %p330 = por %p328, %p329
      %p331 = scmp.ne.s32.totalorder %s323, %s325
      %p332 = scmp.eq.s32.totalorder %s37, 1
      %p333 = por %p331, %p332
      %p334 = scmp.ne.s32.totalorder %s325, %s326
      %p335 = scmp.eq.s32.totalorder %s37, 0
      %p336 = por %p334, %p335
      %p337 = scmp.ne.s32.totalorder %s325, %s326
      %p338 = scmp.eq.s32.totalorder %s38, 1
      %p339 = por %p337, %p338
      %p341 = scmp.ne.s32.totalorder %s326, %s340
      %p342 = scmp.eq.s32.totalorder %s38, 0
      %p343 = por %p341, %p342
      %s345 = sadd.s32 %s344, 1
      %p348 = scmp.eq.s32.totalorder %s32, 1
      %p349 = scmp.ne.s32.totalorder %s344, %s346
      %p350 = scmp.eq.s32.totalorder %s32, 0
      %p351 = por %p349, %p350
      %p352 = scmp.ne.s32.totalorder %s344, %s346
      %p353 = scmp.eq.s32.totalorder %s37, 1
      %p354 = por %p352, %p353
      %p355 = scmp.ne.s32.totalorder %s346, %s347
      %p356 = scmp.eq.s32.totalorder %s37, 0
      %p357 = por %p355, %p356
      %p358 = scmp.ne.s32.totalorder %s346, %s347
      %p359 = scmp.eq.s32.totalorder %s38, 1
      %p360 = por %p358, %p359
      %p362 = scmp.ne.s32.totalorder %s347, %s361
      %p363 = scmp.eq.s32.totalorder %s38, 0
      %p364 = por %p362, %p363
      %s366 = sadd.s32 %s365, 1
      %p369 = scmp.eq.s32.totalorder %s32, 1
      %p370 = scmp.ne.s32.totalorder %s365, %s367
      %p371 = scmp.eq.s32.totalorder %s32, 0
      %p372 = por %p370, %p371
      %p373 = scmp.ne.s32.totalorder %s365, %s367
      %p374 = scmp.eq.s32.totalorder %s37, 1
      %p375 = por %p373, %p374
      %p376 = scmp.ne.s32.totalorder %s367, %s368
      %p377 = scmp.eq.s32.totalorder %s37, 0
      %p378 = por %p376, %p377
      %p379 = scmp.ne.s32.totalorder %s367, %s368
      %p380 = scmp.eq.s32.totalorder %s38, 1
      %p381 = por %p379, %p380
      %p383 = scmp.ne.s32.totalorder %s368, %s382
      %p384 = scmp.eq.s32.totalorder %s38, 0
      %p385 = por %p383, %p384
      %s387 = sadd.s32 %s386, 1
      %p390 = scmp.eq.s32.totalorder %s32, 1
      %p391 = scmp.ne.s32.totalorder %s386, %s388
      %p392 = scmp.eq.s32.totalorder %s32, 0
      %p393 = por %p391, %p392
      %p394 = scmp.ne.s32.totalorder %s386, %s388
      %p395 = scmp.eq.s32.totalorder %s37, 1
      %p396 = por %p394, %p395
      %p397 = scmp.ne.s32.totalorder %s388, %s389
      %p398 = scmp.eq.s32.totalorder %s37, 0
      %p399 = por %p397, %p398
      %p400 = scmp.ne.s32.totalorder %s388, %s389
      %p401 = scmp.eq.s32.totalorder %s38, 1
      %p402 = por %p400, %p401
      %p404 = scmp.ne.s32.totalorder %s389, %s403
      %p405 = scmp.eq.s32.totalorder %s38, 0
      %p406 = por %p404, %p405
      %s407 = ssub.s32 %s39, %s51
      %s408 = ssub.s32 %s40, %s47
      %s409 = sor.u32 %s407, %s408
      %p410 = scmp.eq.s32.totalorder %s409, 0
      %s412 = sadd.s32 %s411, 1
      %s413 = scalar_select %p410, %s411, %s412
      %p416 = pneg %p410
      %p417 = scmp.eq.s32.totalorder %s32, 1
      %p418 = por %p416, %p417
      %p419 = scmp.ne.s32.totalorder %s411, %s414
      %p420 = scmp.eq.s32.totalorder %s32, 0
      %p421 = por %p419, %p420
      %p422 = scmp.ne.s32.totalorder %s411, %s414
      %p423 = scmp.eq.s32.totalorder %s37, 1
      %p424 = por %p422, %p423
      %p425 = scmp.ne.s32.totalorder %s414, %s415
      %p426 = scmp.eq.s32.totalorder %s37, 0
      %p427 = por %p425, %p426
      %p428 = scmp.ne.s32.totalorder %s414, %s415
      %p429 = scmp.eq.s32.totalorder %s38, 1
      %p430 = por %p428, %p429
      %p432 = scmp.ne.s32.totalorder %s415, %s431
      %p433 = scmp.eq.s32.totalorder %s38, 0
      %p434 = por %p432, %p433
      %p435 = scmp.le.s32.totalorder 1, %s32
      %p436 = scmp.lt.s32.totalorder %s32, 3
      %p437 = pnand %p435, %p436
      %p438 = pneg %p437
      // Predicated region
      $region9: #{tpu_custom_call.1} parent=5 // pred_check
        _
      $region10: #{tpu_custom_call.1} parent=5 // pred_check_branch
        %440 = sbr.rel (%p437) target = $region12
      $region11: #{tpu_custom_call.1} parent=5 // pred_region
        %s441 = ssub.s32 %s32, 1
        // Predicated region
        $region13: #{tpu_custom_call.1} parent=11 // pred_check
          %p442 = pneg %p174
        $region14: #{tpu_custom_call.1} parent=11 // pred_check_branch
          %444 = sbr.rel (%p442) target = $region16
        $region15: #{tpu_custom_call.1} parent=11 // pred_region
          %s445 = smul.u32 2, %s42
          %p446 = scmp.lt.s32.totalorder %s445, 1
          %s447 = scalar_select %p446, %s445, 1
          %s448 = smul.addr %s447, 4
          %s449 = scalar_lea.vmem %s4, %s448
          %s450 = smul.u32 2, %s42
        $region16: #{tpu_custom_call.1} parent=11 // pred_fallthru
          _
        // Predicated region
        $region17: #{tpu_custom_call.1} parent=11 // pred_check
          %p451 = pneg %p200
        $region18: #{tpu_custom_call.1} parent=11 // pred_check_branch
          %453 = sbr.rel (%p451) target = $region20
        $region19: #{tpu_custom_call.1} parent=11 // pred_region
          %s454 = smul.u32 2, %s42
          %s456 = ssub.s32 1024, 1024
          %457 = vsyncadd [#allocation9], %s456
          %s458 = smul.addr %s454, 64
          %s459 = scalar_lea.hbm %s5, %s458
          %s460 = sshll.u32 [#allocation8], 4
          %s461 = int_to_ptr.vmem [resolvable:$true] %s460
          %466 = dma.hbm_to_vmem [thread:$0]  %s459, 1024, %s461, [#allocation9], 128, 128, 8
        $region20: #{tpu_custom_call.1} parent=11 // pred_fallthru
          _
        // Predicated region
        $region21: #{tpu_custom_call.1} parent=11 // pred_check
          %p467 = pneg %p226
        $region22: #{tpu_custom_call.1} parent=11 // pred_check_branch
          %469 = sbr.rel (%p467) target = $region24
        $region23: #{tpu_custom_call.1} parent=11 // pred_region
          %s470 = smul.u32 2, %s42
          %s472 = ssub.s32 256, 256
          %473 = vsyncadd [#allocation9], %s472
          %s474 = smul.addr %s470, 64
          %s475 = scalar_lea.hbm %s6, %s474
          %s476 = sshll.u32 [#allocation10], 4
          %s477 = int_to_ptr.vmem [resolvable:$true] %s476
          %482 = dma.hbm_to_vmem [thread:$0]  %s475, 256, %s477, [#allocation9], 128, 128, 8
        $region24: #{tpu_custom_call.1} parent=11 // pred_fallthru
          _
        // Predicated region
        $region25: #{tpu_custom_call.1} parent=11 // pred_check
          %p483 = pneg %p252
        $region26: #{tpu_custom_call.1} parent=11 // pred_check_branch
          %485 = sbr.rel (%p483) target = $region28
        $region27: #{tpu_custom_call.1} parent=11 // pred_region
          %s486 = smul.u32 2, %s42
          %s488 = ssub.s32 64, 64
          %489 = vsyncadd [#allocation12], %s488
          %s490 = smul.addr %s486, 32
          %s491 = scalar_lea.hbm %s7, %s490
          %s493 = sshll.u32 [#allocation11], 4
          %s494 = int_to_ptr.vmem [resolvable:$true] %s493
          %496 = dma.hbm_to_vmem [thread:$0]  %s491, 64, %s494, [#allocation12]
        $region28: #{tpu_custom_call.1} parent=11 // pred_fallthru
          _
        // Predicated region
        $region29: #{tpu_custom_call.1} parent=11 // pred_check
          %p497 = pneg %p273
        $region30: #{tpu_custom_call.1} parent=11 // pred_check_branch
          %499 = sbr.rel (%p497) target = $region32
        $region31: #{tpu_custom_call.1} parent=11 // pred_region
          _
        $region32: #{tpu_custom_call.1} parent=11 // pred_fallthru
          _
        // Predicated region
        $region33: #{tpu_custom_call.1} parent=11 // pred_check
          %p500 = pneg %p294
        $region34: #{tpu_custom_call.1} parent=11 // pred_check_branch
          %502 = sbr.rel (%p500) target = $region36
        $region35: #{tpu_custom_call.1} parent=11 // pred_region
          _
        $region36: #{tpu_custom_call.1} parent=11 // pred_fallthru
          _
        // Predicated region
        $region37: #{tpu_custom_call.1} parent=11 // pred_check
          %p503 = pneg %p315
        $region38: #{tpu_custom_call.1} parent=11 // pred_check_branch
          %505 = sbr.rel (%p503) target = $region40
        $region39: #{tpu_custom_call.1} parent=11 // pred_region
          _
        $region40: #{tpu_custom_call.1} parent=11 // pred_fallthru
          _
        // Predicated region
        $region41: #{tpu_custom_call.1} parent=11 // pred_check
          %p506 = pneg %p336
        $region42: #{tpu_custom_call.1} parent=11 // pred_check_branch
          %508 = sbr.rel (%p506) target = $region44
        $region43: #{tpu_custom_call.1} parent=11 // pred_region
          _
        $region44: #{tpu_custom_call.1} parent=11 // pred_fallthru
          _
        // Predicated region
        $region45: #{tpu_custom_call.1} parent=11 // pred_check
          %p509 = pneg %p357
        $region46: #{tpu_custom_call.1} parent=11 // pred_check_branch
          %511 = sbr.rel (%p509) target = $region48
        $region47: #{tpu_custom_call.1} parent=11 // pred_region
          _
        $region48: #{tpu_custom_call.1} parent=11 // pred_fallthru
          _
        // Predicated region
        $region49: #{tpu_custom_call.1} parent=11 // pred_check
          %p512 = pneg %p378
        $region50: #{tpu_custom_call.1} parent=11 // pred_check_branch
          %514 = sbr.rel (%p512) target = $region52
        $region51: #{tpu_custom_call.1} parent=11 // pred_region
          _
        $region52: #{tpu_custom_call.1} parent=11 // pred_fallthru
          _
        // Predicated region
        $region53: #{tpu_custom_call.1} parent=11 // pred_check
          %p515 = pneg %p399
        $region54: #{tpu_custom_call.1} parent=11 // pred_check_branch
          %517 = sbr.rel (%p515) target = $region56
        $region55: #{tpu_custom_call.1} parent=11 // pred_region
          _
        $region56: #{tpu_custom_call.1} parent=11 // pred_fallthru
          _
      $region12: #{tpu_custom_call.1} parent=5 // pred_fallthru
        _
      %p518 = scmp.lt.s32.totalorder %s32, 2
      // Predicated region
      $region57: #{tpu_custom_call.1} parent=5 // pred_check
        %p519 = pneg %p518
      $region58: #{tpu_custom_call.1} parent=5 // pred_check_branch
        %521 = sbr.rel (%p519) target = $region60
      $region59: #{tpu_custom_call.1} parent=5 // pred_region
        // Predicated region
        $region61: #{tpu_custom_call.1} parent=59 // pred_check
          %p522 = pneg %p64
        $region62: #{tpu_custom_call.1} parent=59 // pred_check_branch
          %524 = sbr.rel (%p522) target = $region64
        $region63: #{tpu_custom_call.1} parent=59 // pred_region
          %s525 = sand.u32 %s54, 1
          %s526 = scalar_lea.sflag [#allocation3], %s525
          %s527 = sand.u32 %s54, 1
          %s528 = smul.addr %s527, 4
          %s529 = scalar_lea.vmem [#allocation2], %s528
          %s531 = ssub.s32 64, 64
          %532 = vsyncadd %s526, %s531
          %s533 = smul.addr %s39, 2
          %s534 = smul.addr %s533, 32
          %s535 = scalar_lea.hbm %s0, %s534
          %s537 = sshll.u32 %s529, 4
          %s538 = int_to_ptr.vmem [resolvable:$true] %s537
          %540 = dma.hbm_to_vmem [thread:$0]  %s535, 64, %s538, %s526
        $region64: #{tpu_custom_call.1} parent=59 // pred_fallthru
          _
        // Predicated region
        $region65: #{tpu_custom_call.1} parent=59 // pred_check
          %p541 = pneg %p90
        $region66: #{tpu_custom_call.1} parent=59 // pred_check_branch
          %543 = sbr.rel (%p541) target = $region68
        $region67: #{tpu_custom_call.1} parent=59 // pred_region
          %s544 = sand.u32 %s32, 1
          %s545 = scalar_lea.sflag [#allocation6], %s544
          %s546 = sand.u32 %s80, 1
          %s547 = smul.addr %s546, 4
          %s548 = scalar_lea.vmem [#allocation5], %s547
          %s550 = ssub.s32 64, 64
          %551 = vsyncadd %s545, %s550
          %s552 = smul.addr %s39, 64
          %s553 = scalar_lea.hbm %s1, %s552
          %s555 = sshll.u32 %s548, 4
          %s556 = int_to_ptr.vmem [resolvable:$true] %s555
          %558 = dma.hbm_to_vmem [thread:$0]  %s553, 64, %s556, %s545
        $region68: #{tpu_custom_call.1} parent=59 // pred_fallthru
          _
        // Predicated region
        $region69: #{tpu_custom_call.1} parent=59 // pred_check
          %p559 = pneg %p116
        $region70: #{tpu_custom_call.1} parent=59 // pred_check_branch
          %561 = sbr.rel (%p559) target = $region72
        $region71: #{tpu_custom_call.1} parent=59 // pred_region
          %s562 = sand.u32 %s32, 1
          %s563 = scalar_lea.sflag [#allocation6], %s562
          %s564 = sand.u32 %s106, 1
          %s565 = smul.addr %s564, 8
          %s566 = scalar_lea.vmem [#allocation7], %s565
          %s568 = ssub.s32 128, 128
          %569 = vsyncadd %s563, %s568
          %s570 = smul.addr %s39, 2
          %s571 = smul.addr %s570, 64
          %s572 = scalar_lea.hbm %s2, %s571
          %s573 = sshll.u32 %s566, 4
          %s574 = int_to_ptr.vmem [resolvable:$true] %s573
          %579 = dma.hbm_to_vmem [thread:$0]  %s572, 128, %s574, %s563, 64, 64, 4
        $region72: #{tpu_custom_call.1} parent=59 // pred_fallthru
          _
        // Predicated region
        $region73: #{tpu_custom_call.1} parent=59 // pred_check
          %p580 = pneg %p142
        $region74: #{tpu_custom_call.1} parent=59 // pred_check_branch
          %582 = sbr.rel (%p580) target = $region76
        $region75: #{tpu_custom_call.1} parent=59 // pred_region
          %p583 = scmp.lt.s32.totalorder %s39, 1
          %s584 = scalar_select %p583, %s39, 1
          %s585 = smul.addr %s584, 2
          %s586 = smul.addr %s585, 4
          %s587 = scalar_lea.vmem %s3, %s586
        $region76: #{tpu_custom_call.1} parent=59 // pred_fallthru
          _
      $region60: #{tpu_custom_call.1} parent=5 // pred_fallthru
        _
      %p588 = scmp.le.s32.totalorder 1, %s32
      %p589 = scmp.lt.s32.totalorder %s32, 3
      %p590 = pnand %p588, %p589
      %p591 = pneg %p590
      // Predicated region
      $region77: #{tpu_custom_call.1} parent=5 // pred_check
        _
      $region78: #{tpu_custom_call.1} parent=5 // pred_check_branch
        %593 = sbr.rel (%p590) target = $region80
      $region79: #{tpu_custom_call.1} parent=5 // pred_region
        %s594 = ssub.s32 %s32, 1
        %s595 = sand.u32 %s57, 1
        %s596 = scalar_lea.sflag [#allocation3], %s595
        %s597 = sand.u32 %s57, 1
        %s598 = smul.addr %s597, 4
        %s599 = scalar_lea.vmem [#allocation2], %s598
        // Predicated region
        $region81: #{tpu_custom_call.1} parent=79 // pred_check
          %p600 = pneg %p70
        $region82: #{tpu_custom_call.1} parent=79 // pred_check_branch
          %602 = sbr.rel (%p600) target = $region84
        $region83: #{tpu_custom_call.1} parent=79 // pred_region
          %603 = dma.done %s596, 64
        $region84: #{tpu_custom_call.1} parent=79 // pred_fallthru
          _
        %s604 = sand.u32 %s37, 1
        %s605 = scalar_lea.sflag [#allocation6], %s604
        %s606 = sand.u32 %s83, 1
        %s607 = smul.addr %s606, 4
        %s608 = scalar_lea.vmem [#allocation5], %s607
        // Predicated region
        $region85: #{tpu_custom_call.1} parent=79 // pred_check
          %p609 = pneg %p96
        $region86: #{tpu_custom_call.1} parent=79 // pred_check_branch
          %611 = sbr.rel (%p609) target = $region88
        $region87: #{tpu_custom_call.1} parent=79 // pred_region
          %612 = dma.done %s605, 64
        $region88: #{tpu_custom_call.1} parent=79 // pred_fallthru
          _
        %s613 = sand.u32 %s37, 1
        %s614 = scalar_lea.sflag [#allocation6], %s613
        %s615 = sand.u32 %s109, 1
        %s616 = smul.addr %s615, 8
        %s617 = scalar_lea.vmem [#allocation7], %s616
        // Predicated region
        $region89: #{tpu_custom_call.1} parent=79 // pred_check
          %p618 = pneg %p122
        $region90: #{tpu_custom_call.1} parent=79 // pred_check_branch
          %620 = sbr.rel (%p618) target = $region92
        $region91: #{tpu_custom_call.1} parent=79 // pred_region
          %621 = dma.done %s614, 128
        $region92: #{tpu_custom_call.1} parent=79 // pred_fallthru
          _
        // Predicated region
        $region93: #{tpu_custom_call.1} parent=79 // pred_check
          %p622 = pneg %p200
        $region94: #{tpu_custom_call.1} parent=79 // pred_check_branch
          %624 = sbr.rel (%p622) target = $region96
        $region95: #{tpu_custom_call.1} parent=79 // pred_region
          %625 = dma.done [#allocation9], 1024
        $region96: #{tpu_custom_call.1} parent=79 // pred_fallthru
          _
        // Predicated region
        $region97: #{tpu_custom_call.1} parent=79 // pred_check
          %p626 = pneg %p226
        $region98: #{tpu_custom_call.1} parent=79 // pred_check_branch
          %628 = sbr.rel (%p626) target = $region100
        $region99: #{tpu_custom_call.1} parent=79 // pred_region
          %629 = dma.done [#allocation9], 256
        $region100: #{tpu_custom_call.1} parent=79 // pred_fallthru
          _
        // Predicated region
        $region101: #{tpu_custom_call.1} parent=79 // pred_check
          %p630 = pneg %p252
        $region102: #{tpu_custom_call.1} parent=79 // pred_check_branch
          %632 = sbr.rel (%p630) target = $region104
        $region103: #{tpu_custom_call.1} parent=79 // pred_region
          %633 = dma.done [#allocation12], 64
        $region104: #{tpu_custom_call.1} parent=79 // pred_fallthru
          _
        %s634 = sand.u32 %s57, 1
        %s635 = scalar_lea.sflag [#allocation3], %s634
        %s636 = sand.u32 %s57, 1
        %s637 = smul.addr %s636, 4
        %s638 = scalar_lea.vmem [#allocation2], %s637
        %p639 = pneg %p70
        %p640 = pneg %p67
        %s641 = sand.u32 %s37, 1
        %s642 = scalar_lea.sflag [#allocation6], %s641
        %s643 = sand.u32 %s83, 1
        %s644 = smul.addr %s643, 4
        %s645 = scalar_lea.vmem [#allocation5], %s644
        %p646 = pneg %p96
        %p647 = pneg %p93
        %s648 = sand.u32 %s37, 1
        %s649 = scalar_lea.sflag [#allocation6], %s648
        %s650 = sand.u32 %s109, 1
        %s651 = smul.addr %s650, 8
        %s652 = scalar_lea.vmem [#allocation7], %s651
        %p653 = pneg %p122
        %p654 = pneg %p119
        %p655 = scmp.lt.s32.totalorder %s41, 1
        %s656 = scalar_select %p655, %s41, 1
        %s657 = smul.addr %s656, 2
        %s658 = smul.addr %s657, 4
        %s659 = scalar_lea.vmem %s3, %s658
        %p660 = pneg %p148
        %p661 = pneg %p145
        %s662 = smul.u32 2, %s42
        %p663 = scmp.lt.s32.totalorder %s662, 1
        %s664 = scalar_select %p663, %s662, 1
        %s665 = smul.addr %s664, 4
        %s666 = scalar_lea.vmem %s4, %s665
        %p667 = pneg %p174
        %p668 = pneg %p171
        %p669 = pneg %p200
        %p670 = pneg %p197
        %p671 = pneg %p226
        %p672 = pneg %p223
        %p673 = pneg %p252
        %p674 = pneg %p249
        %p675 = pneg %p273
        %p676 = pneg %p270
        %p677 = pneg %p294
        %p678 = pneg %p291
        %p679 = pneg %p315
        %p680 = pneg %p312
        %p681 = pneg %p336
        %p682 = pneg %p333
        %p683 = pneg %p357
        %p684 = pneg %p354
        %p685 = pneg %p378
        %p686 = pneg %p375
        %p687 = pneg %p399
        %p688 = pneg %p396
        %p689 = pneg %p427
        %p690 = pneg %p424
        %s691 = sand.u32 %s414, 1
        %s692 = scalar_lea.sflag [#allocation4], %s691
        %s693 = sand.u32 %s414, 1
        %s694 = smul.addr %s693, 64
        %s695 = scalar_lea.vmem [#allocation13], %s694
        %p696 = scmp.lt.s32.totalorder %s41, 1
        %s697 = scalar_select %p696, %s41, 1
        %s698 = smul.addr %s697, 2
        %s699 = smul.addr %s698, 4
        %s700 = scalar_lea.vmem %s3, %s699
        %s701 = smul.u32 2, %s42
        %p702 = scmp.lt.s32.totalorder %s701, 1
        %s703 = scalar_select %p702, %s701, 1
        %s704 = smul.addr %s703, 4
        %s705 = scalar_lea.vmem %s4, %s704
        %s706 = smul.u32 2, %s42
        %s707 = smul.u32 2, %s42
        %s708 = smul.u32 2, %s42
        %s709 = smul.u32 2, %s42
        %s710 = smul.u32 2, %s42
        %v712 = vld [vmem:[%s599] sm:$0xf]
        %v713 = vld [vmem:[%s8] sm:$0xf]
        %v714 = vld [vmem:[%s8 + $0x4] sm:$0xf]
        %v715 = vld [vmem:[%s8 + $0x8] sm:$0xf]
        %v716 = vld [vmem:[%s8 + $0xc] sm:$0xf]
        %v717 = vld [vmem:[%s705] sm:$0xff]
        %v718 = vld [vmem:[%s705 + $0x8] sm:$0xff]
        %v719 = vld [vmem:[%s705 + $0x10] sm:$0xff]
        %v720 = vld [vmem:[%s705 + $0x18] sm:$0xff]
        %v721 = vld [vmem:[%s705 + $0x20] sm:$0xff]
        %v722 = vld [vmem:[%s705 + $0x28] sm:$0xff]
        %v723 = vld [vmem:[%s705 + $0x30] sm:$0xff]
        %v724 = vld [vmem:[%s705 + $0x38] sm:$0xff]
        %v725 = vld [vmem:[%s705 + $0x40] sm:$0xff]
        %v726 = vld [vmem:[%s705 + $0x48] sm:$0xff]
        %v727 = vld [vmem:[%s705 + $0x50] sm:$0xff]
        %v728 = vld [vmem:[%s705 + $0x58] sm:$0xff]
        %v729 = vld [vmem:[%s705 + $0x60] sm:$0xff]
        %v730 = vld [vmem:[%s705 + $0x68] sm:$0xff]
        %v731 = vld [vmem:[%s705 + $0x70] sm:$0xff]
        %v732 = vld [vmem:[%s705 + $0x78] sm:$0xff]
        %v733 = vld [vmem:[%s705 + $0x80] sm:$0xff]
        %v734 = vld [vmem:[%s705 + $0x88] sm:$0xff]
        %v735 = vld [vmem:[%s705 + $0x90] sm:$0xff]
        %v736 = vld [vmem:[%s705 + $0x98] sm:$0xff]
        %v737 = vld [vmem:[%s705 + $0xa0] sm:$0xff]
        %v738 = vld [vmem:[%s705 + $0xa8] sm:$0xff]
        %v739 = vld [vmem:[%s705 + $0xb0] sm:$0xff]
        %v740 = vld [vmem:[%s705 + $0xb8] sm:$0xff]
        %v741 = vld [vmem:[%s705 + $0xc0] sm:$0xff]
        %v742 = vld [vmem:[%s705 + $0xc8] sm:$0xff]
        %v743 = vld [vmem:[%s705 + $0xd0] sm:$0xff]
        %v744 = vld [vmem:[%s705 + $0xd8] sm:$0xff]
        %v745 = vld [vmem:[%s705 + $0xe0] sm:$0xff]
        %v746 = vld [vmem:[%s705 + $0xe8] sm:$0xff]
        %v747 = vld [vmem:[%s705 + $0xf0] sm:$0xff]
        %v748 = vld [vmem:[%s705 + $0xf8] sm:$0xff]
        %v749 = vld [vmem:[%s12] sm:$0xff]
        %v750 = vld [vmem:[%s12 + $0x8] sm:$0xff]
        %v751 = vld [vmem:[%s12 + $0x10] sm:$0xff]
        %v752 = vld [vmem:[%s12 + $0x18] sm:$0xff]
        %754 = vset.pattern.permute.xlu0 0
        %755 = vperm.xlu0 %754, %v749
        %v756 = vpop.permute.xlu0 %755
        %759 = vset.pattern.permute.xlu0 0
        %760 = vperm.xlu0 %759, %v750
        %v761 = vpop.permute.xlu0 %760
        %764 = vset.pattern.permute.xlu0 0
        %765 = vperm.xlu0 %764, %v751
        %v766 = vpop.permute.xlu0 %765
        %769 = vset.pattern.permute.xlu0 0
        %770 = vperm.xlu0 %769, %v752
        %v771 = vpop.permute.xlu0 %770
        %v777 = vunpack.c.l.b16 %v713
        %v778 = vunpack.c.l.b16 %v714
        %v779 = vunpack.c.l.b16 %v715
        %v780 = vunpack.c.l.b16 %v716
        %v781 = vpack.c.b16 %v778, %v777
        %v782 = vpack.c.b16 %v780, %v779
        %v785 = vunpack.c.l.s4 1983009808
        %v786 = vunpack.c.0.s8 %v785
        %v787 = vlaneseq
        %v788 = vshrl.u32 %v787, 7
        %v789 = vsub.s32 %v786, %v788
        %v790 = vrot.slane %v712, %v789
        %v791 = vcombine.high %v790, %v790
        %vm792 = vcmask 31744
        %v794 = vsel %vm792, %v781, 0
        %v797 = vsel %vm792, %v782, 0
        %vm799 = vcmask 1041408
        %v801 = vsel %vm799, %v790, 0
        %v804 = vsel %vm799, %v791, 0
        %806 = vmatprep.subr.bf16.mxu0 %v804
        %807 = vmatpush1.bf16.msra.mxu0 %v801
        %808 = vmatprep.subr.bf16.mxu0 0
        %809 = vmatpush1.bf16.msra.mxu0 0
        %810 = vmatprep.subr.bf16.mxu0 0
        %811 = vmatpush1.bf16.msra.mxu0 0
        %812 = vmatprep.subr.bf16.mxu0 0
        %813 = vmatpush1.bf16.msra.mxu0 0
        %814 = vmatprep.subr.bf16.mxu0 0
        %815 = vmatpush1.bf16.msra.mxu0 0
        %816 = vmatprep.subr.bf16.mxu0 0
        %817 = vmatpush1.bf16.msra.mxu0 0
        %818 = vmatprep.subr.bf16.mxu0 0
        %819 = vmatpush1.bf16.msra.mxu0 0
        %820 = vmatprep.subr.bf16.mxu0 0
        %821 = vmatpush1.bf16.msra.mxu0 0
        %822 = vmatprep.subr.bf16.mxu0 0
        %823 = vmatpush1.bf16.msra.mxu0 0
        %824 = vmatprep.subr.bf16.mxu0 0
        %825 = vmatpush1.bf16.msra.mxu0 0
        %826 = vmatprep.subr.bf16.mxu0 0
        %827 = vmatpush1.bf16.msra.mxu0 0
        %828 = vmatprep.subr.bf16.mxu0 0
        %829 = vmatpush1.bf16.msra.mxu0 0
        %830 = vmatprep.subr.bf16.mxu0 0
        %831 = vmatpush1.bf16.msra.mxu0 0
        %832 = vmatprep.subr.bf16.mxu0 0
        %833 = vmatpush1.bf16.msra.mxu0 0
        %834 = vmatprep.subr.bf16.mxu0 0
        %835 = vmatpush1.bf16.msra.mxu0 0
        %836 = vmatprep.subr.bf16.mxu0 0
        %837 = vmatpush1.bf16.msra.mxu0 0
        %838 = vmatprep.mubr.bf16.mxu0 0
        %839 = vmatmul.mubr.bf16.gmra.mrb[0].mxu0 %v794
        %v840 = vpop.f32.mrb[0].mxu0
        %v841 = vadd.f32 %v756, %v840
        %v842 = vpop.f32.mrb[0].mxu0
        %v843 = vadd.f32 %v756, %v842
        %v844 = vpop.f32.mrb[0].mxu0
        %v845 = vadd.f32 %v761, %v844
        %v846 = vpop.f32.mrb[0].mxu0
        %v847 = vadd.f32 %v761, %v846
        %848 = vmatprep.mubr.bf16.mxu0 0
        %849 = vmatmul.mubr.bf16.gmra.mrb[0].mxu0 %v797
        %v850 = vpop.f32.mrb[0].mxu0
        %v851 = vadd.f32 %v766, %v850
        %v852 = vpop.f32.mrb[0].mxu0
        %v853 = vadd.f32 %v766, %v852
        %v854 = vpop.f32.mrb[0].mxu0
        %v855 = vadd.f32 %v771, %v854
        %v856 = vpop.f32.mrb[0].mxu0
        %v857 = vadd.f32 %v771, %v856
        %858 = vdwg.mxu0
        %v859 = vmax.f32 %v841, 0.0
        %v860 = vmax.f32 %v843, 0.0
        %v861 = vmax.f32 %v845, 0.0
        %v862 = vmax.f32 %v847, 0.0
        %v863 = vmax.f32 %v851, 0.0
        %v864 = vmax.f32 %v853, 0.0
        %v865 = vmax.f32 %v855, 0.0
        %v866 = vmax.f32 %v857, 0.0
        %v867 = vpack.c.bf16 %v861, %v859
        %v868 = vpack.c.bf16 %v862, %v860
        %v869 = vpack.c.bf16 %v865, %v863
        %v870 = vpack.c.bf16 %v866, %v864
        %v903 = vunpack.c.l.b16 %v717
        %v904 = vunpack.c.h.b16 %v717
        %v905 = vunpack.c.l.b16 %v718
        %v906 = vunpack.c.h.b16 %v718
        %v907 = vunpack.c.l.b16 %v719
        %v908 = vunpack.c.h.b16 %v719
        %v909 = vunpack.c.l.b16 %v720
        %v910 = vunpack.c.h.b16 %v720
        %v911 = vunpack.c.l.b16 %v721
        %v912 = vunpack.c.h.b16 %v721
        %v913 = vunpack.c.l.b16 %v722
        %v914 = vunpack.c.h.b16 %v722
        %v915 = vunpack.c.l.b16 %v723
        %v916 = vunpack.c.h.b16 %v723
        %v917 = vunpack.c.l.b16 %v724
        %v918 = vunpack.c.h.b16 %v724
        %v919 = vunpack.c.l.b16 %v725
        %v920 = vunpack.c.h.b16 %v725
        %v921 = vunpack.c.l.b16 %v726
        %v922 = vunpack.c.h.b16 %v726
        %v923 = vunpack.c.l.b16 %v727
        %v924 = vunpack.c.h.b16 %v727
        %v925 = vunpack.c.l.b16 %v728
        %v926 = vunpack.c.h.b16 %v728
        %v927 = vunpack.c.l.b16 %v729
        %v928 = vunpack.c.h.b16 %v729
        %v929 = vunpack.c.l.b16 %v730
        %v930 = vunpack.c.h.b16 %v730
        %v931 = vunpack.c.l.b16 %v731
        %v932 = vunpack.c.h.b16 %v731
        %v933 = vunpack.c.l.b16 %v732
        %v934 = vunpack.c.h.b16 %v732
        %v935 = vunpack.c.l.b16 %v733
        %v936 = vunpack.c.h.b16 %v733
        %v937 = vunpack.c.l.b16 %v734
        %v938 = vunpack.c.h.b16 %v734
        %v939 = vunpack.c.l.b16 %v735
        %v940 = vunpack.c.h.b16 %v735
        %v941 = vunpack.c.l.b16 %v736
        %v942 = vunpack.c.h.b16 %v736
        %v943 = vunpack.c.l.b16 %v737
        %v944 = vunpack.c.h.b16 %v737
        %v945 = vunpack.c.l.b16 %v738
        %v946 = vunpack.c.h.b16 %v738
        %v947 = vunpack.c.l.b16 %v739
        %v948 = vunpack.c.h.b16 %v739
        %v949 = vunpack.c.l.b16 %v740
        %v950 = vunpack.c.h.b16 %v740
        %v951 = vunpack.c.l.b16 %v741
        %v952 = vunpack.c.h.b16 %v741
        %v953 = vunpack.c.l.b16 %v742
        %v954 = vunpack.c.h.b16 %v742
        %v955 = vunpack.c.l.b16 %v743
        %v956 = vunpack.c.h.b16 %v743
        %v957 = vunpack.c.l.b16 %v744
        %v958 = vunpack.c.h.b16 %v744
        %v959 = vunpack.c.l.b16 %v745
        %v960 = vunpack.c.h.b16 %v745
        %v961 = vunpack.c.l.b16 %v746
        %v962 = vunpack.c.h.b16 %v746
        %v963 = vunpack.c.l.b16 %v747
        %v964 = vunpack.c.h.b16 %v747
        %v965 = vunpack.c.l.b16 %v748
        %v966 = vunpack.c.h.b16 %v748
        %v967 = vpack.c.b16 %v905, %v903
        %v968 = vpack.c.b16 %v906, %v904
        %v969 = vpack.c.b16 %v909, %v907
        %v970 = vpack.c.b16 %v910, %v908
        %v971 = vpack.c.b16 %v913, %v911
        %v972 = vpack.c.b16 %v914, %v912
        %v973 = vpack.c.b16 %v917, %v915
        %v974 = vpack.c.b16 %v918, %v916
        %v975 = vpack.c.b16 %v921, %v919
        %v976 = vpack.c.b16 %v922, %v920
        %v977 = vpack.c.b16 %v925, %v923
        %v978 = vpack.c.b16 %v926, %v924
        %v979 = vpack.c.b16 %v929, %v927
        %v980 = vpack.c.b16 %v930, %v928
        %v981 = vpack.c.b16 %v933, %v931
        %v982 = vpack.c.b16 %v934, %v932
        %v983 = vpack.c.b16 %v937, %v935
        %v984 = vpack.c.b16 %v938, %v936
        %v985 = vpack.c.b16 %v941, %v939
        %v986 = vpack.c.b16 %v942, %v940
        %v987 = vpack.c.b16 %v945, %v943
        %v988 = vpack.c.b16 %v946, %v944
        %v989 = vpack.c.b16 %v949, %v947
        %v990 = vpack.c.b16 %v950, %v948
        %v991 = vpack.c.b16 %v953, %v951
        %v992 = vpack.c.b16 %v954, %v952
        %v993 = vpack.c.b16 %v957, %v955
        %v994 = vpack.c.b16 %v958, %v956
        %v995 = vpack.c.b16 %v961, %v959
        %v996 = vpack.c.b16 %v962, %v960
        %v997 = vpack.c.b16 %v965, %v963
        %v998 = vpack.c.b16 %v966, %v964
        %1031 = vmatprep.subr.bf16.mxu0 %v968
        %1032 = vmatpush1.bf16.msra.mxu0 %v967
        %1033 = vmatprep.subr.bf16.mxu0 %v970
        %1034 = vmatpush1.bf16.msra.mxu0 %v969
        %1035 = vmatprep.subr.bf16.mxu0 %v972
        %1036 = vmatpush1.bf16.msra.mxu0 %v971
        %1037 = vmatprep.subr.bf16.mxu0 %v974
        %1038 = vmatpush1.bf16.msra.mxu0 %v973
        %1039 = vmatprep.subr.bf16.mxu0 %v976
        %1040 = vmatpush1.bf16.msra.mxu0 %v975
        %1041 = vmatprep.subr.bf16.mxu0 %v978
        %1042 = vmatpush1.bf16.msra.mxu0 %v977
        %1043 = vmatprep.subr.bf16.mxu0 %v980
        %1044 = vmatpush1.bf16.msra.mxu0 %v979
        %1045 = vmatprep.subr.bf16.mxu0 %v982
        %1046 = vmatpush1.bf16.msra.mxu0 %v981
        %1047 = vmatprep.subr.bf16.mxu0 %v984
        %1048 = vmatpush1.bf16.msra.mxu0 %v983
        %1049 = vmatprep.subr.bf16.mxu0 %v986
        %1050 = vmatpush1.bf16.msra.mxu0 %v985
        %1051 = vmatprep.subr.bf16.mxu0 %v988
        %1052 = vmatpush1.bf16.msra.mxu0 %v987
        %1053 = vmatprep.subr.bf16.mxu0 %v990
        %1054 = vmatpush1.bf16.msra.mxu0 %v989
        %1055 = vmatprep.subr.bf16.mxu0 %v992
        %1056 = vmatpush1.bf16.msra.mxu0 %v991
        %1057 = vmatprep.subr.bf16.mxu0 %v994
        %1058 = vmatpush1.bf16.msra.mxu0 %v993
        %1059 = vmatprep.subr.bf16.mxu0 %v996
        %1060 = vmatpush1.bf16.msra.mxu0 %v995
        %1061 = vmatprep.subr.bf16.mxu0 %v998
        %1062 = vmatpush1.bf16.msra.mxu0 %v997
        %1063 = vmatprep.mubr.bf16.mxu0 %v868
        %1064 = vmatmul.mubr.bf16.gmra.mrb[0].mxu0 %v867
        %v1065 = vpop.f32.mrb[0].mxu0
        %v1066 = vadd.f32 0.0, %v1065
        %v1067 = vpop.f32.mrb[0].mxu0
        %v1068 = vadd.f32 0.0, %v1067
        %v1069 = vpop.f32.mrb[0].mxu0
        %v1070 = vadd.f32 0.0, %v1069
        %v1071 = vpop.f32.mrb[0].mxu0
        %v1072 = vadd.f32 0.0, %v1071
        %1073 = vmatprep.mubr.bf16.mxu0 %v870
        %1074 = vmatmul.mubr.bf16.gmra.mrb[0].mxu0 %v869
        %v1075 = vpop.f32.mrb[0].mxu0
        %v1076 = vadd.f32 0.0, %v1075
        %v1077 = vpop.f32.mrb[0].mxu0
        %v1078 = vadd.f32 0.0, %v1077
        %v1079 = vpop.f32.mrb[0].mxu0
        %v1080 = vadd.f32 0.0, %v1079
        %v1081 = vpop.f32.mrb[0].mxu0
        %v1082 = vadd.f32 0.0, %v1081
        %1083 = vdwg.mxu0
        %v1084 = vpack.c.bf16 %v1070, %v1066
        %v1085 = vpack.c.bf16 %v1072, %v1068
        %v1086 = vpack.c.bf16 %v1080, %v1076
        %v1087 = vpack.c.bf16 %v1082, %v1078
        %v1088 = vld [vmem:[%s13] sm:$0xf]
        %v1089 = vld [vmem:[%s13 + $0x4] sm:$0xf]
        %v1090 = vld [vmem:[%s13 + $0x8] sm:$0xf]
        %v1091 = vld [vmem:[%s13 + $0xc] sm:$0xf]
        %v1092 = vld [vmem:[%s608] sm:$0xf]
        %v1093 = vld [vmem:[%s9] sm:$0xf]
        %v1094 = vld [vmem:[%s9 + $0x4] sm:$0xf]
        %v1095 = vld [vmem:[%s9 + $0x8] sm:$0xf]
        %v1096 = vld [vmem:[%s9 + $0xc] sm:$0xf]
        %v1097 = vld [vmem:[#allocation8] sm:$0xff]
        %v1098 = vld [vmem:[#allocation8 + $0x8] sm:$0xff]
        %v1099 = vld [vmem:[#allocation8 + $0x10] sm:$0xff]
        %v1100 = vld [vmem:[#allocation8 + $0x18] sm:$0xff]
        %v1101 = vld [vmem:[#allocation8 + $0x20] sm:$0xff]
        %v1102 = vld [vmem:[#allocation8 + $0x28] sm:$0xff]
        %v1103 = vld [vmem:[#allocation8 + $0x30] sm:$0xff]
        %v1104 = vld [vmem:[#allocation8 + $0x38] sm:$0xff]
        %s1105 = scalar_lea.vmem %s12, 32
        %v1106 = vld [vmem:[%s1105] sm:$0xff]
        %v1107 = vld [vmem:[%s1105 + $0x8] sm:$0xff]
        %v1108 = vld [vmem:[%s1105 + $0x10] sm:$0xff]
        %v1109 = vld [vmem:[%s1105 + $0x18] sm:$0xff]
        %1111 = vset.pattern.permute.xlu0 0
        %1112 = vperm.xlu0 %1111, %v1106
        %v1113 = vpop.permute.xlu0 %1112
        %1116 = vset.pattern.permute.xlu0 0
        %1117 = vperm.xlu0 %1116, %v1107
        %v1118 = vpop.permute.xlu0 %1117
        %1121 = vset.pattern.permute.xlu0 0
        %1122 = vperm.xlu0 %1121, %v1108
        %v1123 = vpop.permute.xlu0 %1122
        %1126 = vset.pattern.permute.xlu0 0
        %1127 = vperm.xlu0 %1126, %v1109
        %v1128 = vpop.permute.xlu0 %1127
        %v1134 = vunpack.c.l.b16 %v1093
        %v1135 = vunpack.c.l.b16 %v1094
        %v1136 = vunpack.c.l.b16 %v1095
        %v1137 = vunpack.c.l.b16 %v1096
        %v1138 = vpack.c.b16 %v1135, %v1134
        %v1139 = vpack.c.b16 %v1137, %v1136
        %vm1140 = vcmask 64512
        %v1142 = vsel %vm1140, %v1138, 0
        %v1145 = vsel %vm1140, %v1139, 0
        %vm1147 = vcmask 1043456
        %v1149 = vsel %vm1147, %v1092, 0
        %1151 = vmatprep.subr.bf16.mxu0 0
        %1152 = vmatpush1.bf16.msra.mxu0 %v1149
        %1153 = vmatprep.subr.bf16.mxu0 0
        %1154 = vmatpush1.bf16.msra.mxu0 0
        %1155 = vmatprep.subr.bf16.mxu0 0
        %1156 = vmatpush1.bf16.msra.mxu0 0
        %1157 = vmatprep.subr.bf16.mxu0 0
        %1158 = vmatpush1.bf16.msra.mxu0 0
        %1159 = vmatprep.subr.bf16.mxu0 0
        %1160 = vmatpush1.bf16.msra.mxu0 0
        %1161 = vmatprep.subr.bf16.mxu0 0
        %1162 = vmatpush1.bf16.msra.mxu0 0
        %1163 = vmatprep.subr.bf16.mxu0 0
        %1164 = vmatpush1.bf16.msra.mxu0 0
        %1165 = vmatprep.subr.bf16.mxu0 0
        %1166 = vmatpush1.bf16.msra.mxu0 0
        %1167 = vmatprep.subr.bf16.mxu0 0
        %1168 = vmatpush1.bf16.msra.mxu0 0
        %1169 = vmatprep.subr.bf16.mxu0 0
        %1170 = vmatpush1.bf16.msra.mxu0 0
        %1171 = vmatprep.subr.bf16.mxu0 0
        %1172 = vmatpush1.bf16.msra.mxu0 0
        %1173 = vmatprep.subr.bf16.mxu0 0
        %1174 = vmatpush1.bf16.msra.mxu0 0
        %1175 = vmatprep.subr.bf16.mxu0 0
        %1176 = vmatpush1.bf16.msra.mxu0 0
        %1177 = vmatprep.subr.bf16.mxu0 0
        %1178 = vmatpush1.bf16.msra.mxu0 0
        %1179 = vmatprep.subr.bf16.mxu0 0
        %1180 = vmatpush1.bf16.msra.mxu0 0
        %1181 = vmatprep.subr.bf16.mxu0 0
        %1182 = vmatpush1.bf16.msra.mxu0 0
        %1183 = vmatprep.mubr.bf16.mxu0 0
        %1184 = vmatmul.mubr.bf16.gmra.mrb[0].mxu0 %v1142
        %v1185 = vpop.f32.mrb[0].mxu0
        %v1186 = vadd.f32 %v1113, %v1185
        %v1187 = vpop.f32.mrb[0].mxu0
        %v1188 = vpop.f32.mrb[0].mxu0
        %v1189 = vadd.f32 %v1118, %v1188
        %v1190 = vpop.f32.mrb[0].mxu0
        %1191 = vmatprep.mubr.bf16.mxu0 0
        %1192 = vmatmul.mubr.bf16.gmra.mrb[0].mxu0 %v1145
        %v1193 = vpop.f32.mrb[0].mxu0
        %v1194 = vadd.f32 %v1123, %v1193
        %v1195 = vpop.f32.mrb[0].mxu0
        %v1196 = vpop.f32.mrb[0].mxu0
        %v1197 = vadd.f32 %v1128, %v1196
        %v1198 = vpop.f32.mrb[0].mxu0
        %1199 = vdwg.mxu0
        %v1200 = vmax.f32 %v1186, 0.0
        %v1201 = vmax.f32 %v1189, 0.0
        %v1202 = vmax.f32 %v1194, 0.0
        %v1203 = vmax.f32 %v1197, 0.0
        %v1204 = vpack.c.bf16 %v1201, %v1200
        %v1205 = vpack.c.bf16 %v1203, %v1202
        %v1214 = vunpack.c.l.b16 %v1097
        %v1215 = vunpack.c.h.b16 %v1097
        %v1216 = vunpack.c.l.b16 %v1098
        %v1217 = vunpack.c.h.b16 %v1098
        %v1218 = vunpack.c.l.b16 %v1099
        %v1219 = vunpack.c.h.b16 %v1099
        %v1220 = vunpack.c.l.b16 %v1100
        %v1221 = vunpack.c.h.b16 %v1100
        %v1222 = vunpack.c.l.b16 %v1101
        %v1223 = vunpack.c.h.b16 %v1101
        %v1224 = vunpack.c.l.b16 %v1102
        %v1225 = vunpack.c.h.b16 %v1102
        %v1226 = vunpack.c.l.b16 %v1103
        %v1227 = vunpack.c.h.b16 %v1103
        %v1228 = vunpack.c.l.b16 %v1104
        %v1229 = vunpack.c.h.b16 %v1104
        %v1230 = vpack.c.b16 %v1216, %v1214
        %v1231 = vpack.c.b16 %v1217, %v1215
        %v1232 = vpack.c.b16 %v1220, %v1218
        %v1233 = vpack.c.b16 %v1221, %v1219
        %v1234 = vpack.c.b16 %v1224, %v1222
        %v1235 = vpack.c.b16 %v1225, %v1223
        %v1236 = vpack.c.b16 %v1228, %v1226
        %v1237 = vpack.c.b16 %v1229, %v1227
        %vm1246 = vcmask 523264
        %v1248 = vsel %vm1246, %v1204, 0
        %v1251 = vsel %vm1246, %v1205, 0
        %1253 = vmatprep.subr.bf16.mxu0 %v1231
        %1254 = vmatpush1.bf16.msra.mxu0 %v1230
        %1255 = vmatprep.subr.bf16.mxu0 %v1233
        %1256 = vmatpush1.bf16.msra.mxu0 %v1232
        %1257 = vmatprep.subr.bf16.mxu0 %v1235
        %1258 = vmatpush1.bf16.msra.mxu0 %v1234
        %1259 = vmatprep.subr.bf16.mxu0 %v1237
        %1260 = vmatpush1.bf16.msra.mxu0 %v1236
        %1261 = vmatprep.subr.bf16.mxu0 0
        %1262 = vmatpush1.bf16.msra.mxu0 0
        %1263 = vmatprep.subr.bf16.mxu0 0
        %1264 = vmatpush1.bf16.msra.mxu0 0
        %1265 = vmatprep.subr.bf16.mxu0 0
        %1266 = vmatpush1.bf16.msra.mxu0 0
        %1267 = vmatprep.subr.bf16.mxu0 0
        %1268 = vmatpush1.bf16.msra.mxu0 0
        %1269 = vmatprep.subr.bf16.mxu0 0
        %1270 = vmatpush1.bf16.msra.mxu0 0
        %1271 = vmatprep.subr.bf16.mxu0 0
        %1272 = vmatpush1.bf16.msra.mxu0 0
        %1273 = vmatprep.subr.bf16.mxu0 0
        %1274 = vmatpush1.bf16.msra.mxu0 0
        %1275 = vmatprep.subr.bf16.mxu0 0
        %1276 = vmatpush1.bf16.msra.mxu0 0
        %1277 = vmatprep.subr.bf16.mxu0 0
        %1278 = vmatpush1.bf16.msra.mxu0 0
        %1279 = vmatprep.subr.bf16.mxu0 0
        %1280 = vmatpush1.bf16.msra.mxu0 0
        %1281 = vmatprep.subr.bf16.mxu0 0
        %1282 = vmatpush1.bf16.msra.mxu0 0
        %1283 = vmatprep.subr.bf16.mxu0 0
        %1284 = vmatpush1.bf16.msra.mxu0 0
        %1285 = vmatprep.mubr.bf16.mxu0 0
        %1286 = vmatmul.mubr.bf16.gmra.mrb[0].mxu0 %v1248
        %v1287 = vpop.f32.mrb[0].mxu0
        %v1288 = vadd.f32 0.0, %v1287
        %v1289 = vpop.f32.mrb[0].mxu0
        %v1290 = vadd.f32 0.0, %v1289
        %v1291 = vpop.f32.mrb[0].mxu0
        %v1292 = vadd.f32 0.0, %v1291
        %v1293 = vpop.f32.mrb[0].mxu0
        %v1294 = vadd.f32 0.0, %v1293
        %1295 = vmatprep.mubr.bf16.mxu0 0
        %1296 = vmatmul.mubr.bf16.gmra.mrb[0].mxu0 %v1251
        %v1297 = vpop.f32.mrb[0].mxu0
        %v1298 = vadd.f32 0.0, %v1297
        %v1299 = vpop.f32.mrb[0].mxu0
        %v1300 = vadd.f32 0.0, %v1299
        %v1301 = vpop.f32.mrb[0].mxu0
        %v1302 = vadd.f32 0.0, %v1301
        %v1303 = vpop.f32.mrb[0].mxu0
        %v1304 = vadd.f32 0.0, %v1303
        %1305 = vdwg.mxu0
        %v1306 = vpack.c.bf16 %v1292, %v1288
        %v1307 = vpack.c.bf16 %v1294, %v1290
        %v1308 = vpack.c.bf16 %v1302, %v1298
        %v1309 = vpack.c.bf16 %v1304, %v1300
        %s1310 = scalar_lea.vmem %s13, 16
        %v1311 = vld [vmem:[%s1310] sm:$0xf]
        %v1312 = vld [vmem:[%s1310 + $0x4] sm:$0xf]
        %v1313 = vld [vmem:[%s1310 + $0x8] sm:$0xf]
        %v1314 = vld [vmem:[%s1310 + $0xc] sm:$0xf]
        %v1319 = vunpack.c.l.b16 %v1311
        %v1320 = vunpack.c.l.b16 %v1312
        %v1321 = vunpack.c.l.b16 %v1313
        %v1322 = vunpack.c.l.b16 %v1314
        %v1323 = vpack.c.b16 %v1320, %v1319
        %v1324 = vpack.c.b16 %v1322, %v1321
        %vm1325 = vcmask 261120
        %v1327 = vsel %vm1325, %v1323, 0
        %v1330 = vsel %vm1325, %v1324, 0
        %1332 = vmatprep.subr.bf16.mxu0 %v1307
        %1333 = vmatpush1.bf16.msra.mxu0 %v1306
        %1334 = vmatprep.subr.bf16.mxu0 %v1309
        %1335 = vmatpush1.bf16.msra.mxu0 %v1308
        %1336 = vmatprep.subr.bf16.mxu0 0
        %1337 = vmatpush1.bf16.msra.mxu0 0
        %1338 = vmatprep.subr.bf16.mxu0 0
        %1339 = vmatpush1.bf16.msra.mxu0 0
        %1340 = vmatprep.subr.bf16.mxu0 0
        %1341 = vmatpush1.bf16.msra.mxu0 0
        %1342 = vmatprep.subr.bf16.mxu0 0
        %1343 = vmatpush1.bf16.msra.mxu0 0
        %1344 = vmatprep.subr.bf16.mxu0 0
        %1345 = vmatpush1.bf16.msra.mxu0 0
        %1346 = vmatprep.subr.bf16.mxu0 0
        %1347 = vmatpush1.bf16.msra.mxu0 0
        %1348 = vmatprep.subr.bf16.mxu0 0
        %1349 = vmatpush1.bf16.msra.mxu0 0
        %1350 = vmatprep.subr.bf16.mxu0 0
        %1351 = vmatpush1.bf16.msra.mxu0 0
        %1352 = vmatprep.subr.bf16.mxu0 0
        %1353 = vmatpush1.bf16.msra.mxu0 0
        %1354 = vmatprep.subr.bf16.mxu0 0
        %1355 = vmatpush1.bf16.msra.mxu0 0
        %1356 = vmatprep.subr.bf16.mxu0 0
        %1357 = vmatpush1.bf16.msra.mxu0 0
        %1358 = vmatprep.subr.bf16.mxu0 0
        %1359 = vmatpush1.bf16.msra.mxu0 0
        %1360 = vmatprep.subr.bf16.mxu0 0
        %1361 = vmatpush1.bf16.msra.mxu0 0
        %1362 = vmatprep.subr.bf16.mxu0 0
        %1363 = vmatpush1.bf16.msra.mxu0 0
        %1364 = vmatprep.mubr.bf16.mxu0 0
        %1365 = vmatmul.mubr.bf16.gmra.mrb[0].mxu0 %v1327
        %v1366 = vpop.f32.mrb[0].mxu0
        %v1367 = vadd.f32 0.0, %v1366
        %v1368 = vpop.f32.mrb[0].mxu0
        %v1369 = vadd.f32 0.0, %v1368
        %v1370 = vpop.f32.mrb[0].mxu0
        %v1371 = vadd.f32 0.0, %v1370
        %v1372 = vpop.f32.mrb[0].mxu0
        %v1373 = vadd.f32 0.0, %v1372
        %1374 = vmatprep.mubr.bf16.mxu0 0
        %1375 = vmatmul.mubr.bf16.gmra.mrb[0].mxu0 %v1330
        %v1376 = vpop.f32.mrb[0].mxu0
        %v1377 = vadd.f32 0.0, %v1376
        %v1378 = vpop.f32.mrb[0].mxu0
        %v1379 = vadd.f32 0.0, %v1378
        %v1380 = vpop.f32.mrb[0].mxu0
        %v1381 = vadd.f32 0.0, %v1380
        %v1382 = vpop.f32.mrb[0].mxu0
        %v1383 = vadd.f32 0.0, %v1382
        %1384 = vdwg.mxu0
        %v1389 = vunpack.c.l.b16 %v1088
        %v1390 = vunpack.c.l.b16 %v1089
        %v1391 = vunpack.c.l.b16 %v1090
        %v1392 = vunpack.c.l.b16 %v1091
        %v1393 = vpack.c.b16 %v1390, %v1389
        %v1394 = vpack.c.b16 %v1392, %v1391
        %v1396 = vsel %vm1325, %v1393, 0
        %v1399 = vsel %vm1325, %v1394, 0
        %1401 = vmatprep.subr.bf16.mxu0 %v1085
        %1402 = vmatpush1.bf16.msra.mxu0 %v1084
        %1403 = vmatprep.subr.bf16.mxu0 %v1087
        %1404 = vmatpush1.bf16.msra.mxu0 %v1086
        %1405 = vmatprep.subr.bf16.mxu0 0
        %1406 = vmatpush1.bf16.msra.mxu0 0
        %1407 = vmatprep.subr.bf16.mxu0 0
        %1408 = vmatpush1.bf16.msra.mxu0 0
        %1409 = vmatprep.subr.bf16.mxu0 0
        %1410 = vmatpush1.bf16.msra.mxu0 0
        %1411 = vmatprep.subr.bf16.mxu0 0
        %1412 = vmatpush1.bf16.msra.mxu0 0
        %1413 = vmatprep.subr.bf16.mxu0 0
        %1414 = vmatpush1.bf16.msra.mxu0 0
        %1415 = vmatprep.subr.bf16.mxu0 0
        %1416 = vmatpush1.bf16.msra.mxu0 0
        %1417 = vmatprep.subr.bf16.mxu0 0
        %1418 = vmatpush1.bf16.msra.mxu0 0
        %1419 = vmatprep.subr.bf16.mxu0 0
        %1420 = vmatpush1.bf16.msra.mxu0 0
        %1421 = vmatprep.subr.bf16.mxu0 0
        %1422 = vmatpush1.bf16.msra.mxu0 0
        %1423 = vmatprep.subr.bf16.mxu0 0
        %1424 = vmatpush1.bf16.msra.mxu0 0
        %1425 = vmatprep.subr.bf16.mxu0 0
        %1426 = vmatpush1.bf16.msra.mxu0 0
        %1427 = vmatprep.subr.bf16.mxu0 0
        %1428 = vmatpush1.bf16.msra.mxu0 0
        %1429 = vmatprep.subr.bf16.mxu0 0
        %1430 = vmatpush1.bf16.msra.mxu0 0
        %1431 = vmatprep.subr.bf16.mxu0 0
        %1432 = vmatpush1.bf16.msra.mxu0 0
        %1433 = vmatprep.mubr.bf16.mxu0 0
        %1434 = vmatmul.mubr.bf16.gmra.mrb[0].mxu0 %v1396
        %v1435 = vpop.f32.mrb[0].mxu0
        %v1436 = vadd.f32 %v1367, %v1435
        %v1437 = vpop.f32.mrb[0].mxu0
        %v1438 = vadd.f32 %v1369, %v1437
        %v1439 = vpop.f32.mrb[0].mxu0
        %v1440 = vadd.f32 %v1371, %v1439
        %v1441 = vpop.f32.mrb[0].mxu0
        %v1442 = vadd.f32 %v1373, %v1441
        %1443 = vmatprep.mubr.bf16.mxu0 0
        %1444 = vmatmul.mubr.bf16.gmra.mrb[0].mxu0 %v1399
        %v1445 = vpop.f32.mrb[0].mxu0
        %v1446 = vadd.f32 %v1377, %v1445
        %v1447 = vpop.f32.mrb[0].mxu0
        %v1448 = vadd.f32 %v1379, %v1447
        %v1449 = vpop.f32.mrb[0].mxu0
        %v1450 = vadd.f32 %v1381, %v1449
        %v1451 = vpop.f32.mrb[0].mxu0
        %v1452 = vadd.f32 %v1383, %v1451
        %1453 = vdwg.mxu0
        %v1454 = vld [vmem:[%s617] sm:$0xf]
        %v1455 = vld [vmem:[%s617 + $0x4] sm:$0xf]
        %v1456 = vld [vmem:[%s10] sm:$0xf]
        %v1457 = vld [vmem:[%s10 + $0x4] sm:$0xf]
        %v1458 = vld [vmem:[%s10 + $0x8] sm:$0xf]
        %v1459 = vld [vmem:[%s10 + $0xc] sm:$0xf]
        %v1460 = vld [vmem:[#allocation10] sm:$0xff]
        %v1461 = vld [vmem:[#allocation10 + $0x8] sm:$0xff]
        %s1462 = scalar_lea.vmem %s12, 64
        %v1463 = vld [vmem:[%s1462] sm:$0xff]
        %v1464 = vld [vmem:[%s1462 + $0x8] sm:$0xff]
        %v1465 = vld [vmem:[%s1462 + $0x10] sm:$0xff]
        %v1466 = vld [vmem:[%s1462 + $0x18] sm:$0xff]
        %1468 = vset.pattern.permute.xlu0 0
        %1469 = vperm.xlu0 %1468, %v1463
        %v1470 = vpop.permute.xlu0 %1469
        %1473 = vset.pattern.permute.xlu0 0
        %1474 = vperm.xlu0 %1473, %v1464
        %v1475 = vpop.permute.xlu0 %1474
        %1478 = vset.pattern.permute.xlu0 0
        %1479 = vperm.xlu0 %1478, %v1465
        %v1480 = vpop.permute.xlu0 %1479
        %1483 = vset.pattern.permute.xlu0 0
        %1484 = vperm.xlu0 %1483, %v1466
        %v1485 = vpop.permute.xlu0 %1484
        %v1491 = vunpack.c.l.b16 %v1456
        %v1492 = vunpack.c.l.b16 %v1457
        %v1493 = vunpack.c.l.b16 %v1458
        %v1494 = vunpack.c.l.b16 %v1459
        %v1495 = vpack.c.b16 %v1492, %v1491
        %v1496 = vpack.c.b16 %v1494, %v1493
        %v1499 = vunpack.c.l.b16 %v1454
        %v1500 = vunpack.c.l.b16 %v1455
        %v1501 = vpack.c.b16 %v1500, %v1499
        %vm1503 = vcmask 130048
        %v1505 = vsel %vm1503, %v1495, 0
        %v1508 = vsel %vm1503, %v1496, 0
        %1510 = vmatprep.subr.bf16.mxu0 0
        %1511 = vmatpush1.bf16.msra.mxu0 %v1501
        %1512 = vmatprep.subr.bf16.mxu0 0
        %1513 = vmatpush1.bf16.msra.mxu0 0
        %1514 = vmatprep.subr.bf16.mxu0 0
        %1515 = vmatpush1.bf16.msra.mxu0 0
        %1516 = vmatprep.subr.bf16.mxu0 0
        %1517 = vmatpush1.bf16.msra.mxu0 0
        %1518 = vmatprep.subr.bf16.mxu0 0
        %1519 = vmatpush1.bf16.msra.mxu0 0
        %1520 = vmatprep.subr.bf16.mxu0 0
        %1521 = vmatpush1.bf16.msra.mxu0 0
        %1522 = vmatprep.subr.bf16.mxu0 0
        %1523 = vmatpush1.bf16.msra.mxu0 0
        %1524 = vmatprep.subr.bf16.mxu0 0
        %1525 = vmatpush1.bf16.msra.mxu0 0
        %1526 = vmatprep.subr.bf16.mxu0 0
        %1527 = vmatpush1.bf16.msra.mxu0 0
        %1528 = vmatprep.subr.bf16.mxu0 0
        %1529 = vmatpush1.bf16.msra.mxu0 0
        %1530 = vmatprep.subr.bf16.mxu0 0
        %1531 = vmatpush1.bf16.msra.mxu0 0
        %1532 = vmatprep.subr.bf16.mxu0 0
        %1533 = vmatpush1.bf16.msra.mxu0 0
        %1534 = vmatprep.subr.bf16.mxu0 0
        %1535 = vmatpush1.bf16.msra.mxu0 0
        %1536 = vmatprep.subr.bf16.mxu0 0
        %1537 = vmatpush1.bf16.msra.mxu0 0
        %1538 = vmatprep.subr.bf16.mxu0 0
        %1539 = vmatpush1.bf16.msra.mxu0 0
        %1540 = vmatprep.subr.bf16.mxu0 0
        %1541 = vmatpush1.bf16.msra.mxu0 0
        %1542 = vmatprep.mubr.bf16.mxu0 0
        %1543 = vmatmul.mubr.bf16.gmra.mrb[0].mxu0 %v1505
        %v1544 = vpop.f32.mrb[0].mxu0
        %v1545 = vadd.f32 %v1470, %v1544
        %v1546 = vpop.f32.mrb[0].mxu0
        %v1547 = vpop.f32.mrb[0].mxu0
        %v1548 = vadd.f32 %v1475, %v1547
        %v1549 = vpop.f32.mrb[0].mxu0
        %1550 = vmatprep.mubr.bf16.mxu0 0
        %1551 = vmatmul.mubr.bf16.gmra.mrb[0].mxu0 %v1508
        %v1552 = vpop.f32.mrb[0].mxu0
        %v1553 = vadd.f32 %v1480, %v1552
        %v1554 = vpop.f32.mrb[0].mxu0
        %v1555 = vpop.f32.mrb[0].mxu0
        %v1556 = vadd.f32 %v1485, %v1555
        %v1557 = vpop.f32.mrb[0].mxu0
        %1558 = vdwg.mxu0
        %v1559 = vmax.f32 %v1545, 0.0
        %v1560 = vmax.f32 %v1548, 0.0
        %v1561 = vmax.f32 %v1553, 0.0
        %v1562 = vmax.f32 %v1556, 0.0
        %v1563 = vpack.c.bf16 %v1560, %v1559
        %v1564 = vpack.c.bf16 %v1562, %v1561
        %v1567 = vunpack.c.l.b16 %v1460
        %v1568 = vunpack.c.h.b16 %v1460
        %v1569 = vunpack.c.l.b16 %v1461
        %v1570 = vunpack.c.h.b16 %v1461
        %v1571 = vpack.c.b16 %v1569, %v1567
        %v1572 = vpack.c.b16 %v1570, %v1568
        %v1576 = vsel %vm1503, %v1563, 0
        %v1579 = vsel %vm1503, %v1564, 0
        %1581 = vmatprep.subr.bf16.mxu0 %v1572
        %1582 = vmatpush1.bf16.msra.mxu0 %v1571
        %1583 = vmatprep.subr.bf16.mxu0 0
        %1584 = vmatpush1.bf16.msra.mxu0 0
        %1585 = vmatprep.subr.bf16.mxu0 0
        %1586 = vmatpush1.bf16.msra.mxu0 0
        %1587 = vmatprep.subr.bf16.mxu0 0
        %1588 = vmatpush1.bf16.msra.mxu0 0
        %1589 = vmatprep.subr.bf16.mxu0 0
        %1590 = vmatpush1.bf16.msra.mxu0 0
        %1591 = vmatprep.subr.bf16.mxu0 0
        %1592 = vmatpush1.bf16.msra.mxu0 0
        %1593 = vmatprep.subr.bf16.mxu0 0
        %1594 = vmatpush1.bf16.msra.mxu0 0
        %1595 = vmatprep.subr.bf16.mxu0 0
        %1596 = vmatpush1.bf16.msra.mxu0 0
        %1597 = vmatprep.subr.bf16.mxu0 0
        %1598 = vmatpush1.bf16.msra.mxu0 0
        %1599 = vmatprep.subr.bf16.mxu0 0
        %1600 = vmatpush1.bf16.msra.mxu0 0
        %1601 = vmatprep.subr.bf16.mxu0 0
        %1602 = vmatpush1.bf16.msra.mxu0 0
        %1603 = vmatprep.subr.bf16.mxu0 0
        %1604 = vmatpush1.bf16.msra.mxu0 0
        %1605 = vmatprep.subr.bf16.mxu0 0
        %1606 = vmatpush1.bf16.msra.mxu0 0
        %1607 = vmatprep.subr.bf16.mxu0 0
        %1608 = vmatpush1.bf16.msra.mxu0 0
        %1609 = vmatprep.subr.bf16.mxu0 0
        %1610 = vmatpush1.bf16.msra.mxu0 0
        %1611 = vmatprep.subr.bf16.mxu0 0
        %1612 = vmatpush1.bf16.msra.mxu0 0
        %1613 = vmatprep.mubr.bf16.mxu0 0
        %1614 = vmatmul.mubr.bf16.gmra.mrb[0].mxu0 %v1576
        %v1615 = vpop.f32.mrb[0].mxu0
        %v1616 = vadd.f32 0.0, %v1615
        %v1617 = vpop.f32.mrb[0].mxu0
        %v1618 = vadd.f32 0.0, %v1617
        %v1619 = vpop.f32.mrb[0].mxu0
        %v1620 = vadd.f32 0.0, %v1619
        %v1621 = vpop.f32.mrb[0].mxu0
        %v1622 = vadd.f32 0.0, %v1621
        %1623 = vmatprep.mubr.bf16.mxu0 0
        %1624 = vmatmul.mubr.bf16.gmra.mrb[0].mxu0 %v1579
        %v1625 = vpop.f32.mrb[0].mxu0
        %v1626 = vadd.f32 0.0, %v1625
        %v1627 = vpop.f32.mrb[0].mxu0
        %v1628 = vadd.f32 0.0, %v1627
        %v1629 = vpop.f32.mrb[0].mxu0
        %v1630 = vadd.f32 0.0, %v1629
        %v1631 = vpop.f32.mrb[0].mxu0
        %v1632 = vadd.f32 0.0, %v1631
        %1633 = vdwg.mxu0
        %v1634 = vpack.c.bf16 %v1620, %v1616
        %v1635 = vpack.c.bf16 %v1622, %v1618
        %v1636 = vpack.c.bf16 %v1630, %v1626
        %v1637 = vpack.c.bf16 %v1632, %v1628
        %s1638 = scalar_lea.vmem %s13, 32
        %v1639 = vld [vmem:[%s1638] sm:$0xf]
        %v1640 = vld [vmem:[%s1638 + $0x4] sm:$0xf]
        %v1641 = vld [vmem:[%s1638 + $0x8] sm:$0xf]
        %v1642 = vld [vmem:[%s1638 + $0xc] sm:$0xf]
        %v1647 = vunpack.c.l.b16 %v1639
        %v1648 = vunpack.c.l.b16 %v1640
        %v1649 = vunpack.c.l.b16 %v1641
        %v1650 = vunpack.c.l.b16 %v1642
        %v1651 = vpack.c.b16 %v1648, %v1647
        %v1652 = vpack.c.b16 %v1650, %v1649
        %v1654 = vsel %vm1325, %v1651, 0
        %v1657 = vsel %vm1325, %v1652, 0
        %1659 = vmatprep.subr.bf16.mxu0 %v1635
        %1660 = vmatpush1.bf16.msra.mxu0 %v1634
        %1661 = vmatprep.subr.bf16.mxu0 %v1637
        %1662 = vmatpush1.bf16.msra.mxu0 %v1636
        %1663 = vmatprep.subr.bf16.mxu0 0
        %1664 = vmatpush1.bf16.msra.mxu0 0
        %1665 = vmatprep.subr.bf16.mxu0 0
        %1666 = vmatpush1.bf16.msra.mxu0 0
        %1667 = vmatprep.subr.bf16.mxu0 0
        %1668 = vmatpush1.bf16.msra.mxu0 0
        %1669 = vmatprep.subr.bf16.mxu0 0
        %1670 = vmatpush1.bf16.msra.mxu0 0
        %1671 = vmatprep.subr.bf16.mxu0 0
        %1672 = vmatpush1.bf16.msra.mxu0 0
        %1673 = vmatprep.subr.bf16.mxu0 0
        %1674 = vmatpush1.bf16.msra.mxu0 0
        %1675 = vmatprep.subr.bf16.mxu0 0
        %1676 = vmatpush1.bf16.msra.mxu0 0
        %1677 = vmatprep.subr.bf16.mxu0 0
        %1678 = vmatpush1.bf16.msra.mxu0 0
        %1679 = vmatprep.subr.bf16.mxu0 0
        %1680 = vmatpush1.bf16.msra.mxu0 0
        %1681 = vmatprep.subr.bf16.mxu0 0
        %1682 = vmatpush1.bf16.msra.mxu0 0
        %1683 = vmatprep.subr.bf16.mxu0 0
        %1684 = vmatpush1.bf16.msra.mxu0 0
        %1685 = vmatprep.subr.bf16.mxu0 0
        %1686 = vmatpush1.bf16.msra.mxu0 0
        %1687 = vmatprep.subr.bf16.mxu0 0
        %1688 = vmatpush1.bf16.msra.mxu0 0
        %1689 = vmatprep.subr.bf16.mxu0 0
        %1690 = vmatpush1.bf16.msra.mxu0 0
        %1691 = vmatprep.mubr.bf16.mxu0 0
        %1692 = vmatmul.mubr.bf16.gmra.mrb[0].mxu0 %v1654
        %v1693 = vpop.f32.mrb[0].mxu0
        %v1694 = vadd.f32 0.0, %v1693
        %v1695 = vpop.f32.mrb[0].mxu0
        %v1696 = vadd.f32 0.0, %v1695
        %v1697 = vpop.f32.mrb[0].mxu0
        %v1698 = vadd.f32 0.0, %v1697
        %v1699 = vpop.f32.mrb[0].mxu0
        %v1700 = vadd.f32 0.0, %v1699
        %1701 = vmatprep.mubr.bf16.mxu0 0
        %1702 = vmatmul.mubr.bf16.gmra.mrb[0].mxu0 %v1657
        %v1703 = vpop.f32.mrb[0].mxu0
        %v1704 = vadd.f32 0.0, %v1703
        %v1705 = vpop.f32.mrb[0].mxu0
        %v1706 = vadd.f32 0.0, %v1705
        %v1707 = vpop.f32.mrb[0].mxu0
        %v1708 = vadd.f32 0.0, %v1707
        %v1709 = vpop.f32.mrb[0].mxu0
        %v1710 = vadd.f32 0.0, %v1709
        %1711 = vdwg.mxu0
        %v1712 = vadd.f32 %v1436, %v1694
        %v1713 = vadd.f32 %v1438, %v1696
        %v1714 = vadd.f32 %v1440, %v1698
        %v1715 = vadd.f32 %v1442, %v1700
        %v1716 = vadd.f32 %v1446, %v1704
        %v1717 = vadd.f32 %v1448, %v1706
        %v1718 = vadd.f32 %v1450, %v1708
        %v1719 = vadd.f32 %v1452, %v1710
        %v1720 = vld [vmem:[%s700] sm:$0xf]
        %v1721 = vld [vmem:[%s700 + $0x4] sm:$0xf]
        %v1722 = vld [vmem:[%s11] sm:$0xf]
        %v1723 = vld [vmem:[%s11 + $0x4] sm:$0xf]
        %v1724 = vld [vmem:[%s11 + $0x8] sm:$0xf]
        %v1725 = vld [vmem:[%s11 + $0xc] sm:$0xf]
        %v1726 = vld [vmem:[#allocation11] sm:$0xf]
        %s1727 = scalar_lea.vmem %s12, 96
        %v1728 = vld [vmem:[%s1727] sm:$0xff]
        %v1729 = vld [vmem:[%s1727 + $0x8] sm:$0xff]
        %v1730 = vld [vmem:[%s1727 + $0x10] sm:$0xff]
        %v1731 = vld [vmem:[%s1727 + $0x18] sm:$0xff]
        %1733 = vset.pattern.permute.xlu0 0
        %1734 = vperm.xlu0 %1733, %v1728
        %v1735 = vpop.permute.xlu0 %1734
        %1738 = vset.pattern.permute.xlu0 0
        %1739 = vperm.xlu0 %1738, %v1729
        %v1740 = vpop.permute.xlu0 %1739
        %1743 = vset.pattern.permute.xlu0 0
        %1744 = vperm.xlu0 %1743, %v1730
        %v1745 = vpop.permute.xlu0 %1744
        %1748 = vset.pattern.permute.xlu0 0
        %1749 = vperm.xlu0 %1748, %v1731
        %v1750 = vpop.permute.xlu0 %1749
        %v1756 = vunpack.c.l.b16 %v1722
        %v1757 = vunpack.c.l.b16 %v1723
        %v1758 = vunpack.c.l.b16 %v1724
        %v1759 = vunpack.c.l.b16 %v1725
        %v1760 = vpack.c.b16 %v1757, %v1756
        %v1761 = vpack.c.b16 %v1759, %v1758
        %v1764 = vunpack.c.l.b16 %v1720
        %v1765 = vunpack.c.l.b16 %v1721
        %v1766 = vpack.c.b16 %v1765, %v1764
        %v1769 = vsel %vm1503, %v1760, 0
        %v1772 = vsel %vm1503, %v1761, 0
        %1774 = vmatprep.subr.bf16.mxu0 0
        %1775 = vmatpush1.bf16.msra.mxu0 %v1766
        %1776 = vmatprep.subr.bf16.mxu0 0
        %1777 = vmatpush1.bf16.msra.mxu0 0
        %1778 = vmatprep.subr.bf16.mxu0 0
        %1779 = vmatpush1.bf16.msra.mxu0 0
        %1780 = vmatprep.subr.bf16.mxu0 0
        %1781 = vmatpush1.bf16.msra.mxu0 0
        %1782 = vmatprep.subr.bf16.mxu0 0
        %1783 = vmatpush1.bf16.msra.mxu0 0
        %1784 = vmatprep.subr.bf16.mxu0 0
        %1785 = vmatpush1.bf16.msra.mxu0 0
        %1786 = vmatprep.subr.bf16.mxu0 0
        %1787 = vmatpush1.bf16.msra.mxu0 0
        %1788 = vmatprep.subr.bf16.mxu0 0
        %1789 = vmatpush1.bf16.msra.mxu0 0
        %1790 = vmatprep.subr.bf16.mxu0 0
        %1791 = vmatpush1.bf16.msra.mxu0 0
        %1792 = vmatprep.subr.bf16.mxu0 0
        %1793 = vmatpush1.bf16.msra.mxu0 0
        %1794 = vmatprep.subr.bf16.mxu0 0
        %1795 = vmatpush1.bf16.msra.mxu0 0
        %1796 = vmatprep.subr.bf16.mxu0 0
        %1797 = vmatpush1.bf16.msra.mxu0 0
        %1798 = vmatprep.subr.bf16.mxu0 0
        %1799 = vmatpush1.bf16.msra.mxu0 0
        %1800 = vmatprep.subr.bf16.mxu0 0
        %1801 = vmatpush1.bf16.msra.mxu0 0
        %1802 = vmatprep.subr.bf16.mxu0 0
        %1803 = vmatpush1.bf16.msra.mxu0 0
        %1804 = vmatprep.subr.bf16.mxu0 0
        %1805 = vmatpush1.bf16.msra.mxu0 0
        %1806 = vmatprep.mubr.bf16.mxu0 0
        %1807 = vmatmul.mubr.bf16.gmra.mrb[0].mxu0 %v1769
        %v1808 = vpop.f32.mrb[0].mxu0
        %v1809 = vadd.f32 %v1735, %v1808
        %v1810 = vpop.f32.mrb[0].mxu0
        %v1811 = vpop.f32.mrb[0].mxu0
        %v1812 = vadd.f32 %v1740, %v1811
        %v1813 = vpop.f32.mrb[0].mxu0
        %1814 = vmatprep.mubr.bf16.mxu0 0
        %1815 = vmatmul.mubr.bf16.gmra.mrb[0].mxu0 %v1772
        %v1816 = vpop.f32.mrb[0].mxu0
        %v1817 = vadd.f32 %v1745, %v1816
        %v1818 = vpop.f32.mrb[0].mxu0
        %v1819 = vpop.f32.mrb[0].mxu0
        %v1820 = vadd.f32 %v1750, %v1819
        %v1821 = vpop.f32.mrb[0].mxu0
        %1822 = vdwg.mxu0
        %v1823 = vmax.f32 %v1809, 0.0
        %v1824 = vmax.f32 %v1812, 0.0
        %v1825 = vmax.f32 %v1817, 0.0
        %v1826 = vmax.f32 %v1820, 0.0
        %v1827 = vpack.c.bf16 %v1824, %v1823
        %v1828 = vpack.c.bf16 %v1826, %v1825
        %v1831 = vunpack.c.l.s4 1983009808
        %v1832 = vunpack.c.0.s8 %v1831
        %v1833 = vlaneseq
        %v1834 = vshrl.u32 %v1833, 7
        %v1835 = vsub.s32 %v1832, %v1834
        %v1836 = vrot.slane %v1726, %v1835
        %v1837 = vcombine.high %v1836, %v1836
        %v1839 = vsel %vm792, %v1827, 0
        %v1842 = vsel %vm792, %v1828, 0
        %v1845 = vsel %vm799, %v1836, 0
        %v1848 = vsel %vm799, %v1837, 0
        %1850 = vmatprep.subr.bf16.mxu0 %v1848
        %1851 = vmatpush1.bf16.msra.mxu0 %v1845
        %1852 = vmatprep.subr.bf16.mxu0 0
        %1853 = vmatpush1.bf16.msra.mxu0 0
        %1854 = vmatprep.subr.bf16.mxu0 0
        %1855 = vmatpush1.bf16.msra.mxu0 0
        %1856 = vmatprep.subr.bf16.mxu0 0
        %1857 = vmatpush1.bf16.msra.mxu0 0
        %1858 = vmatprep.subr.bf16.mxu0 0
        %1859 = vmatpush1.bf16.msra.mxu0 0
        %1860 = vmatprep.subr.bf16.mxu0 0
        %1861 = vmatpush1.bf16.msra.mxu0 0
        %1862 = vmatprep.subr.bf16.mxu0 0
        %1863 = vmatpush1.bf16.msra.mxu0 0
        %1864 = vmatprep.subr.bf16.mxu0 0
        %1865 = vmatpush1.bf16.msra.mxu0 0
        %1866 = vmatprep.subr.bf16.mxu0 0
        %1867 = vmatpush1.bf16.msra.mxu0 0
        %1868 = vmatprep.subr.bf16.mxu0 0
        %1869 = vmatpush1.bf16.msra.mxu0 0
        %1870 = vmatprep.subr.bf16.mxu0 0
        %1871 = vmatpush1.bf16.msra.mxu0 0
        %1872 = vmatprep.subr.bf16.mxu0 0
        %1873 = vmatpush1.bf16.msra.mxu0 0
        %1874 = vmatprep.subr.bf16.mxu0 0
        %1875 = vmatpush1.bf16.msra.mxu0 0
        %1876 = vmatprep.subr.bf16.mxu0 0
        %1877 = vmatpush1.bf16.msra.mxu0 0
        %1878 = vmatprep.subr.bf16.mxu0 0
        %1879 = vmatpush1.bf16.msra.mxu0 0
        %1880 = vmatprep.subr.bf16.mxu0 0
        %1881 = vmatpush1.bf16.msra.mxu0 0
        %1882 = vmatprep.mubr.bf16.mxu0 0
        %1883 = vmatmul.mubr.bf16.gmra.mrb[0].mxu0 %v1839
        %v1884 = vpop.f32.mrb[0].mxu0
        %v1885 = vadd.f32 0.0, %v1884
        %v1886 = vpop.f32.mrb[0].mxu0
        %v1887 = vadd.f32 0.0, %v1886
        %v1888 = vpop.f32.mrb[0].mxu0
        %v1889 = vadd.f32 0.0, %v1888
        %v1890 = vpop.f32.mrb[0].mxu0
        %v1891 = vadd.f32 0.0, %v1890
        %1892 = vmatprep.mubr.bf16.mxu0 0
        %1893 = vmatmul.mubr.bf16.gmra.mrb[0].mxu0 %v1842
        %v1894 = vpop.f32.mrb[0].mxu0
        %v1895 = vadd.f32 0.0, %v1894
        %v1896 = vpop.f32.mrb[0].mxu0
        %v1897 = vadd.f32 0.0, %v1896
        %v1898 = vpop.f32.mrb[0].mxu0
        %v1899 = vadd.f32 0.0, %v1898
        %v1900 = vpop.f32.mrb[0].mxu0
        %v1901 = vadd.f32 0.0, %v1900
        %1902 = vdwg.mxu0
        %v1903 = vpack.c.bf16 %v1889, %v1885
        %v1904 = vpack.c.bf16 %v1891, %v1887
        %v1905 = vpack.c.bf16 %v1899, %v1895
        %v1906 = vpack.c.bf16 %v1901, %v1897
        %s1907 = scalar_lea.vmem %s13, 48
        %v1908 = vld [vmem:[%s1907] sm:$0xf]
        %v1909 = vld [vmem:[%s1907 + $0x4] sm:$0xf]
        %v1910 = vld [vmem:[%s1907 + $0x8] sm:$0xf]
        %v1911 = vld [vmem:[%s1907 + $0xc] sm:$0xf]
        %v1916 = vunpack.c.l.b16 %v1908
        %v1917 = vunpack.c.l.b16 %v1909
        %v1918 = vunpack.c.l.b16 %v1910
        %v1919 = vunpack.c.l.b16 %v1911
        %v1920 = vpack.c.b16 %v1917, %v1916
        %v1921 = vpack.c.b16 %v1919, %v1918
        %v1923 = vsel %vm1325, %v1920, 0
        %v1926 = vsel %vm1325, %v1921, 0
        %1928 = vmatprep.subr.bf16.mxu0 %v1904
        %1929 = vmatpush1.bf16.msra.mxu0 %v1903
        %1930 = vmatprep.subr.bf16.mxu0 %v1906
        %1931 = vmatpush1.bf16.msra.mxu0 %v1905
        %1932 = vmatprep.subr.bf16.mxu0 0
        %1933 = vmatpush1.bf16.msra.mxu0 0
        %1934 = vmatprep.subr.bf16.mxu0 0
        %1935 = vmatpush1.bf16.msra.mxu0 0
        %1936 = vmatprep.subr.bf16.mxu0 0
        %1937 = vmatpush1.bf16.msra.mxu0 0
        %1938 = vmatprep.subr.bf16.mxu0 0
        %1939 = vmatpush1.bf16.msra.mxu0 0
        %1940 = vmatprep.subr.bf16.mxu0 0
        %1941 = vmatpush1.bf16.msra.mxu0 0
        %1942 = vmatprep.subr.bf16.mxu0 0
        %1943 = vmatpush1.bf16.msra.mxu0 0
        %1944 = vmatprep.subr.bf16.mxu0 0
        %1945 = vmatpush1.bf16.msra.mxu0 0
        %1946 = vmatprep.subr.bf16.mxu0 0
        %1947 = vmatpush1.bf16.msra.mxu0 0
        %1948 = vmatprep.subr.bf16.mxu0 0
        %1949 = vmatpush1.bf16.msra.mxu0 0
        %1950 = vmatprep.subr.bf16.mxu0 0
        %1951 = vmatpush1.bf16.msra.mxu0 0
        %1952 = vmatprep.subr.bf16.mxu0 0
        %1953 = vmatpush1.bf16.msra.mxu0 0
        %1954 = vmatprep.subr.bf16.mxu0 0
        %1955 = vmatpush1.bf16.msra.mxu0 0
        %1956 = vmatprep.subr.bf16.mxu0 0
        %1957 = vmatpush1.bf16.msra.mxu0 0
        %1958 = vmatprep.subr.bf16.mxu0 0
        %1959 = vmatpush1.bf16.msra.mxu0 0
        %1960 = vmatprep.mubr.bf16.mxu0 0
        %1961 = vmatmul.mubr.bf16.gmra.mrb[0].mxu0 %v1923
        %v1962 = vpop.f32.mrb[0].mxu0
        %v1963 = vadd.f32 0.0, %v1962
        %v1964 = vpop.f32.mrb[0].mxu0
        %v1965 = vadd.f32 0.0, %v1964
        %v1966 = vpop.f32.mrb[0].mxu0
        %v1967 = vadd.f32 0.0, %v1966
        %v1968 = vpop.f32.mrb[0].mxu0
        %v1969 = vadd.f32 0.0, %v1968
        %1970 = vmatprep.mubr.bf16.mxu0 0
        %1971 = vmatmul.mubr.bf16.gmra.mrb[0].mxu0 %v1926
        %v1972 = vpop.f32.mrb[0].mxu0
        %v1973 = vadd.f32 0.0, %v1972
        %v1974 = vpop.f32.mrb[0].mxu0
        %v1975 = vadd.f32 0.0, %v1974
        %v1976 = vpop.f32.mrb[0].mxu0
        %v1977 = vadd.f32 0.0, %v1976
        %v1978 = vpop.f32.mrb[0].mxu0
        %v1979 = vadd.f32 0.0, %v1978
        %1980 = vdwg.mxu0
        %v1981 = vadd.f32 %v1712, %v1963
        %v1982 = vadd.f32 %v1713, %v1965
        %v1983 = vadd.f32 %v1714, %v1967
        %v1984 = vadd.f32 %v1715, %v1969
        %v1985 = vadd.f32 %v1716, %v1973
        %v1986 = vadd.f32 %v1717, %v1975
        %v1987 = vadd.f32 %v1718, %v1977
        %v1988 = vadd.f32 %v1719, %v1979
        %v1989 = vld [vmem:[%s14] sm:$0xff]
        %v1990 = vld [vmem:[%s14 + $0x8] sm:$0xff]
        %v1991 = vld [vmem:[%s14 + $0x10] sm:$0xff]
        %v1992 = vld [vmem:[%s14 + $0x18] sm:$0xff]
        %1994 = vset.pattern.permute.xlu0 0
        %1995 = vperm.xlu0 %1994, %v1989
        %v1996 = vpop.permute.xlu0 %1995
        %1999 = vset.pattern.permute.xlu0 0
        %2000 = vperm.xlu0 %1999, %v1990
        %v2001 = vpop.permute.xlu0 %2000
        %2004 = vset.pattern.permute.xlu0 0
        %2005 = vperm.xlu0 %2004, %v1991
        %v2006 = vpop.permute.xlu0 %2005
        %2009 = vset.pattern.permute.xlu0 0
        %2010 = vperm.xlu0 %2009, %v1992
        %v2011 = vpop.permute.xlu0 %2010
        %v2013 = vadd.f32 %v1981, %v1996
        %v2014 = vadd.f32 %v1982, %v1996
        %v2015 = vadd.f32 %v1983, %v2001
        %v2016 = vadd.f32 %v1984, %v2001
        %v2017 = vadd.f32 %v1985, %v2006
        %v2018 = vadd.f32 %v1986, %v2006
        %v2019 = vadd.f32 %v1987, %v2011
        %v2020 = vadd.f32 %v1988, %v2011
        %v2021 = vmax.f32 %v2013, 0.0
        %v2022 = vmax.f32 %v2014, 0.0
        %v2023 = vmax.f32 %v2015, 0.0
        %v2024 = vmax.f32 %v2016, 0.0
        %v2025 = vmax.f32 %v2017, 0.0
        %v2026 = vmax.f32 %v2018, 0.0
        %v2027 = vmax.f32 %v2019, 0.0
        %v2028 = vmax.f32 %v2020, 0.0
        %2029 = vst [vmem:[%s695] sm:$0xff] %v2021
        %2030 = vst [vmem:[%s695 + $0x8] sm:$0xff] %v2022
        %2031 = vst [vmem:[%s695 + $0x10] sm:$0xff] %v2023
        %2032 = vst [vmem:[%s695 + $0x18] sm:$0xff] %v2024
        %2033 = vst [vmem:[%s695 + $0x20] sm:$0xff] %v2025
        %2034 = vst [vmem:[%s695 + $0x28] sm:$0xff] %v2026
        %2035 = vst [vmem:[%s695 + $0x30] sm:$0xff] %v2027
        %2036 = vst [vmem:[%s695 + $0x38] sm:$0xff] %v2028
        %s2037 = sand.u32 %s414, 1
        %s2038 = scalar_lea.sflag [#allocation4], %s2037
        %s2039 = sand.u32 %s414, 1
        %s2040 = smul.addr %s2039, 64
        %s2041 = scalar_lea.vmem [#allocation13], %s2040
        // Predicated region
        $region105: #{tpu_custom_call.1} parent=79 // pred_check
          %p2042 = pneg %p424
        $region106: #{tpu_custom_call.1} parent=79 // pred_check_branch
          %2044 = sbr.rel (%p2042) target = $region108
        $region107: #{tpu_custom_call.1} parent=79 // pred_region
          %s2045 = smul.u32 2, %s42
          %s2047 = ssub.s32 1024, 1024
          %2048 = vsyncadd %s2038, %s2047
          %s2049 = smul.addr %s41, 8
          %s2050 = sadd.s32 %s2045, %s2049
          %s2051 = smul.addr %s2050, 128
          %s2052 = scalar_lea.hbm %s15, %s2051
          %s2053 = sshll.u32 %s2041, 4
          %s2054 = int_to_ptr.vmem [resolvable:$true] %s2053
          %2059 = dma.vmem_to_hbm [thread:$0]  %s2054, 1024, %s2052, %s2038, 256, 256, 16
        $region108: #{tpu_custom_call.1} parent=79 // pred_fallthru
          _
      $region80: #{tpu_custom_call.1} parent=5 // pred_fallthru
        _
      %p2060 = scmp.le.s32.totalorder 2, %s32
      // Predicated region
      $region109: #{tpu_custom_call.1} parent=5 // pred_check
        %p2061 = pneg %p2060
      $region110: #{tpu_custom_call.1} parent=5 // pred_check_branch
        %2063 = sbr.rel (%p2061) target = $region112
      $region111: #{tpu_custom_call.1} parent=5 // pred_region
        %s2064 = ssub.s32 %s32, 2
        // Predicated region
        $region113: #{tpu_custom_call.1} parent=111 // pred_check
          %p2065 = pneg %p430
        $region114: #{tpu_custom_call.1} parent=111 // pred_check_branch
          %2067 = sbr.rel (%p2065) target = $region116
        $region115: #{tpu_custom_call.1} parent=111 // pred_region
          %s2068 = sand.u32 %s415, 1
          %s2069 = scalar_lea.sflag [#allocation4], %s2068
          %s2070 = sand.u32 %s415, 1
          %s2071 = smul.addr %s2070, 64
          %s2072 = scalar_lea.vmem [#allocation13], %s2071
          %2073 = dma.done %s2069, 1024
        $region116: #{tpu_custom_call.1} parent=111 // pred_fallthru
          _
      $region112: #{tpu_custom_call.1} parent=5 // pred_fallthru
        _
    $region6: #{tpu_custom_call.1} parent=1 // loop_footer
      %s36 = sadd.s32 1, %s32
    $region7: #{tpu_custom_call.1} parent=1 // loop_footer_branch
      %31 = sbr.rel target = $region3
    $region8: #{tpu_custom_call.1} parent=1 // loop_exit
      _
    %2074 = vsyncpa [#allocation3], 1
    %s2075 = scalar_lea.sflag [#allocation3], 1
    %2076 = vsyncpa %s2075, 1
    %2077 = vsyncpa [#allocation6], 1
    %s2078 = scalar_lea.sflag [#allocation6], 1
    %2079 = vsyncpa %s2078, 1
    %2080 = vsyncpa [#allocation9], 1
    %2081 = vsyncpa [#allocation12], 1
    %2082 = vsyncpa [#allocation4], 1
    %s2083 = scalar_lea.sflag [#allocation4], 1
    %2084 = vsyncpa %s2083, 1

</llo_original>
